<compile_context>
chip_gen: v7x
topology: tpu7x:2x2x1
jax: 0.10.0
libtpu: 0.0.40
codegen_flags: <defaults>
</compile_context>

<pallas_src>
import functools

import jax
import jax.numpy as jnp
from jax.experimental import pallas as pl
from jax.experimental.pallas import tpu as pltpu


LANE = 128  # pad all feature dims to multiples of this


def _round_up(x, m):
    return ((x + m - 1) // m) * m


def _vmem_limit_bytes():
    """Per-generation VMEM limit: ~104 MiB on v5e/v6e (128 MiB), 48 MiB on v7x."""
    cap = 64 * 1024 * 1024
    try:
        info = pltpu.get_tpu_info()
        cap = int(getattr(info, "vmem_capacity_bytes", cap) or cap)
    except Exception:
        pass
    if cap >= 96 * 1024 * 1024:
        return 104 * 1024 * 1024          # v5e / v6e
    return 48 * 1024 * 1024               # v7x (64 MiB physical per TC)


# ==========================================================================
# Path A: VMEM-resident L_hat -- the entire 2-layer forward in ONE kernel.
# ==========================================================================
def _fused_forward_kernel(l_ref, x_ref, w1_ref, b1_ref, w2_ref, b2_ref, o_ref,
                          *, order):
    """L_hat loaded once; Chebyshev recursion in f32; combine+bias+ReLU fused."""
    l = l_ref[...]

    def conv(t0, w_ref, b_ref, relu):
        acc = jnp.dot(t0, w_ref[0], preferred_element_type=jnp.float32)
        if order > 1:
            t_prev = t0
            t_cur = jnp.dot(l, t0.astype(l.dtype),
                            preferred_element_type=jnp.float32)
            acc = acc + jnp.dot(t_cur, w_ref[1], preferred_element_type=jnp.float32)
            for k in range(2, order):
                t_new = 2.0 * jnp.dot(l, t_cur.astype(l.dtype),
                                      preferred_element_type=jnp.float32) - t_prev
                acc = acc + jnp.dot(t_new, w_ref[k],
                                    preferred_element_type=jnp.float32)
                t_prev, t_cur = t_cur, t_new
        acc = acc + b_ref[...]
        return jnp.maximum(acc, 0.0) if relu else acc

    h = conv(x_ref[...].astype(jnp.float32), w1_ref, b1_ref, True)
    o_ref[...] = conv(h, w2_ref, b2_ref, False).astype(o_ref.dtype)


def _resident_forward(lhat, x, w1, b1, w2, b2, *, order, vmem_limit):
    n_pad = lhat.shape[0]
    f_out_pad = w2.shape[2]
    kernel = functools.partial(_fused_forward_kernel, order=order)
    # No grid: all operands live whole in VMEM for the single invocation.
    return pl.pallas_call(
        kernel,
        out_shape=jax.ShapeDtypeStruct((n_pad, f_out_pad), jnp.float32),
        compiler_params=pltpu.CompilerParams(vmem_limit_bytes=vmem_limit),
    )(lhat, x, w1, b1, w2, b2)


# ==========================================================================
# Path B: streamed L_hat (large graphs) -- one kernel per Chebyshev step,
# row tiles "parallel" (megacore), column/reduction tiles "arbitrary".
# ==========================================================================
def _cheb_first_kernel(l_ref, t_ref, o_ref, acc_ref):
    """T_1 row tile:  acc += L[i,j] @ T_0[j];  store at last j."""
    @pl.when(pl.program_id(1) == 0)
    def _init():
        acc_ref[...] = jnp.zeros_like(acc_ref)

    acc_ref[...] += jnp.dot(l_ref[...], t_ref[...].astype(l_ref.dtype),
                            preferred_element_type=jnp.float32)

    @pl.when(pl.program_id(1) == pl.num_programs(1) - 1)
    def _fin():
        o_ref[...] = acc_ref[...].astype(o_ref.dtype)


def _cheb_recur_kernel(l_ref, t_ref, prev_ref, o_ref, acc_ref):
    """T_k row tile:  acc += L[i,j] @ T_{k-1}[j];  T_k = 2*acc - T_{k-2}."""
    @pl.when(pl.program_id(1) == 0)
    def _init():
        acc_ref[...] = jnp.zeros_like(acc_ref)

    acc_ref[...] += jnp.dot(l_ref[...], t_ref[...].astype(l_ref.dtype),
                            preferred_element_type=jnp.float32)

    @pl.when(pl.program_id(1) == pl.num_programs(1) - 1)
    def _fin():
        o_ref[...] = (2.0 * acc_ref[...] - prev_ref[...]).astype(o_ref.dtype)


def _cheb_step_streamed(lhat, t_prev1, t_prev2, tm, tn, vmem_limit):
    """One Chebyshev recursion step.  L_hat bf16 streamed; T_k kept in f32."""
    n_pad = lhat.shape[0]
    f_pad = t_prev1.shape[1]
    grid = (n_pad // tm, n_pad // tn)

    in_specs = [
        pl.BlockSpec((tm, tn), lambda i, j: (i, j)),       # L_hat tile (streamed)
        pl.BlockSpec((tn, f_pad), lambda i, j: (j, 0)),    # T_{k-1} column block
    ]
    args = [lhat, t_prev1]
    if t_prev2 is None:
        kernel = _cheb_first_kernel
    else:
        kernel = _cheb_recur_kernel
        in_specs.append(pl.BlockSpec((tm, f_pad), lambda i, j: (i, 0)))  # T_{k-2}
        args.append(t_prev2)

    return pl.pallas_call(
        kernel,
        out_shape=jax.ShapeDtypeStruct((n_pad, f_pad), jnp.float32),
        grid_spec=pltpu.PrefetchScalarGridSpec(
            num_scalar_prefetch=0,
            grid=grid,
            in_specs=in_specs,
            out_specs=pl.BlockSpec((tm, f_pad), lambda i, j: (i, 0)),
            scratch_shapes=[pltpu.VMEM((tm, f_pad), jnp.float32)],
        ),
        compiler_params=pltpu.CompilerParams(
            dimension_semantics=("parallel", "arbitrary"),
            vmem_limit_bytes=vmem_limit,
        ),
    )(*args)


def _combine_kernel(*refs, order, apply_relu):
    """out row tile = sum_k T_k @ W_k + b (+ReLU).  T_k are K separate inputs
    (no concatenated staging array)."""
    t_refs = refs[:order]
    w_ref = refs[order]
    b_ref = refs[order + 1]
    o_ref = refs[order + 2]

    acc = jnp.dot(t_refs[0][...], w_ref[0], preferred_element_type=jnp.float32)
    for k in range(1, order):
        acc = acc + jnp.dot(t_refs[k][...], w_ref[k],
                            preferred_element_type=jnp.float32)
    acc = acc + b_ref[...]
    if apply_relu:
        acc = jnp.maximum(acc, 0.0)
    o_ref[...] = acc.astype(o_ref.dtype)


def _combine_streamed(ts, w_pad, b_pad, tm, apply_relu, vmem_limit):
    order = len(ts)
    n_pad, f_pad = ts[0].shape
    f_out_pad = w_pad.shape[2]
    kernel = functools.partial(_combine_kernel, order=order, apply_relu=apply_relu)
    in_specs = ([pl.BlockSpec((tm, f_pad), lambda i: (i, 0))] * order
                + [pl.BlockSpec((order, f_pad, f_out_pad), lambda i: (0, 0, 0)),
                   pl.BlockSpec((1, f_out_pad), lambda i: (0, 0))])
    return pl.pallas_call(
        kernel,
        out_shape=jax.ShapeDtypeStruct((n_pad, f_out_pad), jnp.float32),
        grid=(n_pad // tm,),
        in_specs=in_specs,
        out_specs=pl.BlockSpec((tm, f_out_pad), lambda i: (i, 0)),
        compiler_params=pltpu.CompilerParams(
            dimension_semantics=("parallel",),
            vmem_limit_bytes=vmem_limit,
        ),
    )(*ts, w_pad, b_pad)


def _chebconv_streamed(lhat, x, w, b, *, apply_relu, tm, tn, vmem_limit):
    """One ChebConv layer on padded operands, streamed-L path."""
    order, f_in, f_out = w.shape
    f_pad = x.shape[1]
    f_out_pad = _round_up(f_out, LANE)
    w_pad, b_pad = _pad_weights(w, b, f_pad, f_out_pad)

    ts = [x]                                            # T_0 (f32)
    if order > 1:
        ts.append(_cheb_step_streamed(lhat, ts[0], None, tm, tn, vmem_limit))
        for _ in range(2, order):
            ts.append(_cheb_step_streamed(lhat, ts[-1], ts[-2], tm, tn, vmem_limit))
    return _combine_streamed(ts, w_pad, b_pad, tm, apply_relu, vmem_limit)


# ==========================================================================
# Graph preprocessing + full forward pass.
# ==========================================================================
def _pad_weights(w, b, f_in_pad, f_out_pad):
    order, f_in, f_out = w.shape
    w_pad = jnp.pad(w, ((0, 0), (0, f_in_pad - f_in),
                        (0, f_out_pad - f_out))).astype(jnp.float32)
    b_pad = jnp.pad(b.reshape(1, f_out),
                    ((0, 0), (0, f_out_pad - f_out))).astype(jnp.float32)
    return w_pad, b_pad


def build_scaled_laplacian(edge_index, edge_weight, num_nodes):
    """Dense L_hat = (2/lambda_max)(I - D^{-1/2} A D^{-1/2}) - I, lambda_max = 2."""
    row, col = edge_index[0], edge_index[1]
    a = jnp.zeros((num_nodes, num_nodes), jnp.float32).at[row, col].add(edge_weight)
    deg = a.sum(axis=1)
    dinv_sqrt = jnp.where(deg > 0.0,
                          jax.lax.rsqrt(jnp.where(deg > 0.0, deg, 1.0)), 0.0)
    lap = (jnp.eye(num_nodes, dtype=jnp.float32)
           - dinv_sqrt[:, None] * a * dinv_sqrt[None, :])
    lambda_max = 2.0
    return (2.0 / lambda_max) * lap - jnp.eye(num_nodes, dtype=jnp.float32)


def chebnet_forward(x, edge_index, edge_weight, params, *, force_streamed=False):
    n, f_in = x.shape
    order, _, num_hid = params["w1"].shape
    num_classes = params["w2"].shape[2]
    vmem_limit = _vmem_limit_bytes()

    f_pad = _round_up(f_in, LANE)
    hid_pad = _round_up(num_hid, LANE)
    cls_pad = _round_up(num_classes, LANE)
    fmax = max(f_pad, hid_pad, cls_pad)

    lhat = build_scaled_laplacian(edge_index, edge_weight, n)

    # ---- resident (single fused kernel) path: pick L dtype by VMEM fit -------
    n_res = max(_round_up(n, LANE), LANE)
    budget = int(0.8 * vmem_limit)

    def _fits(l_bytes):
        need = (n_res * n_res * l_bytes              # resident L_hat
                + 8 * n_res * fmax * 4               # x, h, T_k temps, acc, out (slack)
                + 2 * order * fmax * fmax * 4        # both padded weight stacks
                + 4 * fmax * 4)                      # biases
        return need <= budget

    resident = (not force_streamed) and (_fits(2) or _fits(4))

    if resident:
        # f32 L if it fits (best precision); bf16 L doubles the node threshold.
        l_dtype = jnp.float32 if _fits(4) else jnp.bfloat16
        n_pad = n_res
        # Cast before padding: never materialize an f32 N_pad^2 intermediate.
        lhat_p = jnp.pad(lhat.astype(l_dtype), ((0, n_pad - n), (0, n_pad - n)))
        x_p = jnp.pad(x.astype(jnp.float32), ((0, n_pad - n), (0, f_pad - f_in)))
        w1_p, b1_p = _pad_weights(params["w1"], params["b1"], f_pad, hid_pad)
        w2_p, b2_p = _pad_weights(params["w2"], params["b2"], hid_pad, cls_pad)
        out = _resident_forward(lhat_p, x_p, w1_p, b1_p, w2_p, b2_p,
                                order=order, vmem_limit=vmem_limit)
        return out[:n, :num_classes]

    # ---- streamed path (large graphs): bf16 L_hat tiles, f32 T_k --------------
    # Pad N to a multiple of the tile so _pick_tile-style collapse can't happen;
    # use 1024 tiles only when that still leaves >=2 parallel row tiles (megacore).
    n_pad = max(_round_up(n, 512), 512)
    if n_pad % 1024 == 0 and n_pad // 1024 >= 2:
        tm = tn = 1024
    else:
        tm = tn = 512

    lhat_p = jnp.pad(lhat.astype(jnp.bfloat16), ((0, n_pad - n), (0, n_pad - n)))
    x_p = jnp.pad(x.astype(jnp.float32), ((0, n_pad - n), (0, f_pad - f_in)))

    # dropout_pre -> identity (eval)
    h = _chebconv_streamed(lhat_p, x_p, params["w1"], params["b1"],
                           apply_relu=True, tm=tm, tn=tn, vmem_limit=vmem_limit)
    # dropout_in -> identity (eval)
    out = _chebconv_streamed(lhat_p, h, params["w2"], params["b2"],
                             apply_relu=False, tm=tm, tn=tn, vmem_limit=vmem_limit)
    # dropout_suf -> identity (eval)
    return out[:n, :num_classes]


def init_params(key, num_features, num_hid, num_classes, order):
    k1, k2 = jax.random.split(key)
    # chebconv1.lin.weight: kaiming_normal_(nonlinearity='relu'), fan_in = K * F_in
    std1 = (2.0 / (order * num_features)) ** 0.5
    w1 = std1 * jax.random.normal(k1, (order, num_features, num_hid), jnp.float32)
    b1 = jnp.zeros((num_hid,), jnp.float32)
    # chebconv2.lin.weight: xavier_normal_, fan_in = K * num_hid, fan_out = classes
    std2 = (2.0 / (order * num_hid + num_classes)) ** 0.5
    w2 = std2 * jax.random.normal(k2, (order, num_hid, num_classes), jnp.float32)
    b2 = jnp.zeros((num_classes,), jnp.float32)
    return {"w1": w1, "b1": b1, "w2": w2, "b2": b2}


def _chebnet_reference(x, edge_index, edge_weight, params):
    """Pure-JAX high-precision reference for validation."""
    def _mm(a, b):
        return jnp.dot(a, b, precision=jax.lax.Precision.HIGHEST)

    lhat = build_scaled_laplacian(edge_index, edge_weight, x.shape[0])

    def conv(h, w, b):
        ts = [h]
        if w.shape[0] > 1:
            ts.append(_mm(lhat, h))
            for _ in range(2, w.shape[0]):
                ts.append(2.0 * _mm(lhat, ts[-1]) - ts[-2])
        return sum(_mm(t, w[k]) for k, t in enumerate(ts)) + b.reshape(1, -1)

    h = jnp.maximum(conv(x, params["w1"], params["b1"]), 0.0)
    return conv(h, params["w2"], params["b2"])


if __name__ == "__main__":
    # Small synthetic graph: 16 nodes, bidirectional ring, 8 features,
    # 32 hidden units, 4 classes, Chebyshev order K=3.
    num_nodes, num_features, num_hid, num_classes, order = 16, 8, 32, 4, 3

    key = jax.random.PRNGKey(0)
    kx, kp = jax.random.split(key)

    x = jax.random.normal(kx, (num_nodes, num_features), jnp.float32)

    src = jnp.arange(num_nodes, dtype=jnp.int32)
    dst = (src + 1) % num_nodes
    edge_index = jnp.stack([jnp.concatenate([src, dst]),
                            jnp.concatenate([dst, src])], axis=0)   # (2, 2N)
    edge_weight = jnp.ones((edge_index.shape[1],), jnp.float32)

    params = init_params(kp, num_features, num_hid, num_classes, order)

    ref = _chebnet_reference(x, edge_index, edge_weight, params)

    # Path A: VMEM-resident L_hat, whole forward fused into one kernel
    # (this is the path selected for a graph of this size).
    out = jax.jit(chebnet_forward)(x, edge_index, edge_weight, params)
    jax.block_until_ready(out)
    assert out.shape == (num_nodes, num_classes) and out.dtype == jnp.float32
    err_resident = float(jnp.max(jnp.abs(out - ref)))
    assert err_resident < 5e-2, f"resident-path error too large: {err_resident}"

    # Path B: streamed bf16 L_hat tiles + multi-input combine, forced here to also
    # exercise the large-graph path on the same small graph.
    out_streamed = jax.jit(
        functools.partial(chebnet_forward, force_streamed=True)
    )(x, edge_index, edge_weight, params)
    jax.block_until_ready(out_streamed)
    err_streamed = float(jnp.max(jnp.abs(out_streamed - ref)))
    assert err_streamed < 1e-1, f"streamed-path error too large: {err_streamed}"

    print("KERNEL_OK")
</pallas_src>

<mosaic_0001>
module attributes {stable_mosaic.version = 11 : i64} {
  func.func private @main(%arg0: i32) attributes {dimension_semantics = [#tpu.dimension_semantics<core_parallel>], iteration_bounds = array<i64: 2>, tpu.core_type = #tpu.core_type<sc_scalar_subcore>, window_params = []} {
    return
  }
}

module attributes {stable_mosaic.version = 11 : i64} {
  func.func private @main(%arg0: i32) attributes {dimension_semantics = [#tpu.dimension_semantics<core_parallel>], iteration_bounds = array<i64: 2>, tpu.core_type = #tpu.core_type<sc_scalar_subcore>, window_params = []} {
    return
  }
}

module attributes {stable_mosaic.version = 11 : i64} {
  func.func @_fused_forward_kernel(%arg0: memref<128x128xf32, #tpu.memory_space<vmem>>, %arg1: memref<128x128xf32, #tpu.memory_space<vmem>>, %arg2: memref<3x128x128xf32, #tpu.memory_space<vmem>>, %arg3: memref<1x128xf32, #tpu.memory_space<vmem>>, %arg4: memref<3x128x128xf32, #tpu.memory_space<vmem>>, %arg5: memref<1x128xf32, #tpu.memory_space<vmem>>, %arg6: memref<128x128xf32, #tpu.memory_space<vmem>>) attributes {dimension_semantics = [], scalar_prefetch = 0 : i64, scratch_operands = 0 : i64, tpu.core_type = #tpu.core_type<tc>} {
    %c0 = arith.constant 0 : index
    %c0_0 = arith.constant 0 : index
    %0 = vector.load %arg0[%c0, %c0_0] : memref<128x128xf32, #tpu.memory_space<vmem>>, vector<128x128xf32>
    %c0_1 = arith.constant 0 : index
    %c0_2 = arith.constant 0 : index
    %1 = vector.load %arg1[%c0_1, %c0_2] : memref<128x128xf32, #tpu.memory_space<vmem>>, vector<128x128xf32>
    %c0_3 = arith.constant 0 : index
    %c0_4 = arith.constant 0 : index
    %c0_5 = arith.constant 0 : index
    %2 = vector.load %arg2[%c0_3, %c0_4, %c0_5] : memref<3x128x128xf32, #tpu.memory_space<vmem>>, vector<1x128x128xf32>
    %3 = vector.shape_cast %2 : vector<1x128x128xf32> to vector<128x128xf32>
    %cst = arith.constant dense<0.000000e+00> : vector<128x128xf32>
    %4 = tpu.matmul %1, %3, %cst {dimension_numbers = #tpu.dot_dimension_numbers<[1], [0], [0], [1], [0, 0, 1, 1], [], []>} : vector<128x128xf32>, vector<128x128xf32>, vector<128x128xf32> -> vector<128x128xf32>
    %cst_6 = arith.constant dense<0.000000e+00> : vector<128x128xf32>
    %5 = tpu.matmul %0, %1, %cst_6 {dimension_numbers = #tpu.dot_dimension_numbers<[1], [0], [0], [1], [0, 0, 1, 1], [], []>} : vector<128x128xf32>, vector<128x128xf32>, vector<128x128xf32> -> vector<128x128xf32>
    %c1 = arith.constant 1 : index
    %c0_7 = arith.constant 0 : index
    %c0_8 = arith.constant 0 : index
    %6 = vector.load %arg2[%c1, %c0_7, %c0_8] : memref<3x128x128xf32, #tpu.memory_space<vmem>>, vector<1x128x128xf32>
    %7 = vector.shape_cast %6 : vector<1x128x128xf32> to vector<128x128xf32>
    %cst_9 = arith.constant dense<0.000000e+00> : vector<128x128xf32>
    %8 = tpu.matmul %5, %7, %cst_9 {dimension_numbers = #tpu.dot_dimension_numbers<[1], [0], [0], [1], [0, 0, 1, 1], [], []>} : vector<128x128xf32>, vector<128x128xf32>, vector<128x128xf32> -> vector<128x128xf32>
    %9 = arith.addf %4, %8 : vector<128x128xf32>
    %cst_10 = arith.constant dense<0.000000e+00> : vector<128x128xf32>
    %10 = tpu.matmul %0, %5, %cst_10 {dimension_numbers = #tpu.dot_dimension_numbers<[1], [0], [0], [1], [0, 0, 1, 1], [], []>} : vector<128x128xf32>, vector<128x128xf32>, vector<128x128xf32> -> vector<128x128xf32>
    %cst_11 = arith.constant 2.000000e+00 : f32
    %11 = vector.broadcast %cst_11 : f32 to vector<128x128xf32>
    %12 = arith.mulf %11, %10 : vector<128x128xf32>
    %13 = arith.subf %12, %1 : vector<128x128xf32>
    %c2 = arith.constant 2 : index
    %c0_12 = arith.constant 0 : index
    %c0_13 = arith.constant 0 : index
    %14 = vector.load %arg2[%c2, %c0_12, %c0_13] : memref<3x128x128xf32, #tpu.memory_space<vmem>>, vector<1x128x128xf32>
    %15 = vector.shape_cast %14 : vector<1x128x128xf32> to vector<128x128xf32>
    %cst_14 = arith.constant dense<0.000000e+00> : vector<128x128xf32>
    %16 = tpu.matmul %13, %15, %cst_14 {dimension_numbers = #tpu.dot_dimension_numbers<[1], [0], [0], [1], [0, 0, 1, 1], [], []>} : vector<128x128xf32>, vector<128x128xf32>, vector<128x128xf32> -> vector<128x128xf32>
    %17 = arith.addf %9, %16 : vector<128x128xf32>
    %c0_15 = arith.constant 0 : index
    %c0_16 = arith.constant 0 : index
    %18 = vector.load %arg3[%c0_15, %c0_16] : memref<1x128xf32, #tpu.memory_space<vmem>>, vector<1x128xf32>
    %19 = vector.broadcast %18 : vector<1x128xf32> to vector<128x128xf32>
    %20 = arith.addf %17, %19 : vector<128x128xf32>
    %cst_17 = arith.constant 0.000000e+00 : f32
    %21 = vector.broadcast %cst_17 : f32 to vector<128x128xf32>
    %22 = arith.maximumf %20, %21 : vector<128x128xf32>
    %c0_18 = arith.constant 0 : index
    %c0_19 = arith.constant 0 : index
    %c0_20 = arith.constant 0 : index
    %23 = vector.load %arg4[%c0_18, %c0_19, %c0_20] : memref<3x128x128xf32, #tpu.memory_space<vmem>>, vector<1x128x128xf32>
    %24 = vector.shape_cast %23 : vector<1x128x128xf32> to vector<128x128xf32>
    %cst_21 = arith.constant dense<0.000000e+00> : vector<128x128xf32>
    %25 = tpu.matmul %22, %24, %cst_21 {dimension_numbers = #tpu.dot_dimension_numbers<[1], [0], [0], [1], [0, 0, 1, 1], [], []>} : vector<128x128xf32>, vector<128x128xf32>, vector<128x128xf32> -> vector<128x128xf32>
    %cst_22 = arith.constant dense<0.000000e+00> : vector<128x128xf32>
    %26 = tpu.matmul %0, %22, %cst_22 {dimension_numbers = #tpu.dot_dimension_numbers<[1], [0], [0], [1], [0, 0, 1, 1], [], []>} : vector<128x128xf32>, vector<128x128xf32>, vector<128x128xf32> -> vector<128x128xf32>
    %c1_23 = arith.constant 1 : index
    %c0_24 = arith.constant 0 : index
    %c0_25 = arith.constant 0 : index
    %27 = vector.load %arg4[%c1_23, %c0_24, %c0_25] : memref<3x128x128xf32, #tpu.memory_space<vmem>>, vector<1x128x128xf32>
    %28 = vector.shape_cast %27 : vector<1x128x128xf32> to vector<128x128xf32>
    %cst_26 = arith.constant dense<0.000000e+00> : vector<128x128xf32>
    %29 = tpu.matmul %26, %28, %cst_26 {dimension_numbers = #tpu.dot_dimension_numbers<[1], [0], [0], [1], [0, 0, 1, 1], [], []>} : vector<128x128xf32>, vector<128x128xf32>, vector<128x128xf32> -> vector<128x128xf32>
    %30 = arith.addf %25, %29 : vector<128x128xf32>
    %cst_27 = arith.constant dense<0.000000e+00> : vector<128x128xf32>
    %31 = tpu.matmul %0, %26, %cst_27 {dimension_numbers = #tpu.dot_dimension_numbers<[1], [0], [0], [1], [0, 0, 1, 1], [], []>} : vector<128x128xf32>, vector<128x128xf32>, vector<128x128xf32> -> vector<128x128xf32>
    %cst_28 = arith.constant 2.000000e+00 : f32
    %32 = vector.broadcast %cst_28 : f32 to vector<128x128xf32>
    %33 = arith.mulf %32, %31 : vector<128x128xf32>
    %34 = arith.subf %33, %22 : vector<128x128xf32>
    %c2_29 = arith.constant 2 : index
    %c0_30 = arith.constant 0 : index
    %c0_31 = arith.constant 0 : index
    %35 = vector.load %arg4[%c2_29, %c0_30, %c0_31] : memref<3x128x128xf32, #tpu.memory_space<vmem>>, vector<1x128x128xf32>
    %36 = vector.shape_cast %35 : vector<1x128x128xf32> to vector<128x128xf32>
    %cst_32 = arith.constant dense<0.000000e+00> : vector<128x128xf32>
    %37 = tpu.matmul %34, %36, %cst_32 {dimension_numbers = #tpu.dot_dimension_numbers<[1], [0], [0], [1], [0, 0, 1, 1], [], []>} : vector<128x128xf32>, vector<128x128xf32>, vector<128x128xf32> -> vector<128x128xf32>
    %38 = arith.addf %30, %37 : vector<128x128xf32>
    %c0_33 = arith.constant 0 : index
    %c0_34 = arith.constant 0 : index
    %39 = vector.load %arg5[%c0_33, %c0_34] : memref<1x128xf32, #tpu.memory_space<vmem>>, vector<1x128xf32>
    %40 = vector.broadcast %39 : vector<1x128xf32> to vector<128x128xf32>
    %41 = arith.addf %38, %40 : vector<128x128xf32>
    %c0_35 = arith.constant 0 : index
    %c0_36 = arith.constant 0 : index
    %42 = vector.load %arg6[%c0_35, %c0_36] : memref<128x128xf32, #tpu.memory_space<vmem>>, vector<128x128xf32>
    tpu.vector_store %arg6[%c0_35, %c0_36], %41 {strides = array<i32>} : memref<128x128xf32, #tpu.memory_space<vmem>>, vector<128x128xf32>,
    return
  }
}

</mosaic_0001>

<llo_original>
// kernel: chebnet_forward.1
$region0: #{chebnet_forward.1}
  #allocation0 [shape = 'u32[]', space=smem, size = 0x4, offset = 0x4, fixed_abs, tag = 'smem constant byte address 0x4 - core index']
  #allocation1 [shape = 'u32[144,128]{1,0:T(1,128)}', space=vmem, size = 0x12000, scoped, tag = 'internal scratch']
  %s0 = inlined_call_operand.vmem [shape: f32[128,128], index: 0, kind: input, shape index: {}]
  %s1 = inlined_call_operand.vmem [shape: f32[128,128], index: 1, kind: input, shape index: {}]
  %s2 = inlined_call_operand.vmem [shape: f32[3,128,128], index: 2, kind: input, shape index: {}]
  %s3 = inlined_call_operand.vmem [shape: f32[1,128], index: 3, kind: input, shape index: {}]
  %s4 = inlined_call_operand.vmem [shape: f32[3,128,128], index: 4, kind: input, shape index: {}]
  %s5 = inlined_call_operand.vmem [shape: f32[1,128], index: 5, kind: input, shape index: {}]
  %s6 = inlined_call_operand.vmem [shape: f32[128,128], index: 6, kind: output, shape index: {}]
  %s7 = sld [smem:[#allocation0]]
  $region34: #{chebnet_forward.1} parent=0
    _
  %s9 = ssub.s32 1, %s7
  %s10 = scalar_select 0, %s9, %s7
  // Predicated region
  $region2: #{chebnet_forward.1} parent=0 // pred_check
    _
  $region3: #{chebnet_forward.1} parent=0 // pred_check_branch
    %12 = sbr.rel (0) target = $region5
  $region4: #{chebnet_forward.1} parent=0 // pred_region
    _
  $region5: #{chebnet_forward.1} parent=0 // pred_fallthru
    _
  // Predicated region
  $region6: #{chebnet_forward.1} parent=0 // pred_check
    _
  $region7: #{chebnet_forward.1} parent=0 // pred_check_branch
    %14 = sbr.rel (0) target = $region9
  $region8: #{chebnet_forward.1} parent=0 // pred_region
    _
  $region9: #{chebnet_forward.1} parent=0 // pred_fallthru
    _
  // Predicated region
  $region10: #{chebnet_forward.1} parent=0 // pred_check
    _
  $region11: #{chebnet_forward.1} parent=0 // pred_check_branch
    %16 = sbr.rel (0) target = $region13
  $region12: #{chebnet_forward.1} parent=0 // pred_region
    _
  $region13: #{chebnet_forward.1} parent=0 // pred_fallthru
    _
  // Predicated region
  $region14: #{chebnet_forward.1} parent=0 // pred_check
    _
  $region15: #{chebnet_forward.1} parent=0 // pred_check_branch
    %18 = sbr.rel (0) target = $region17
  $region16: #{chebnet_forward.1} parent=0 // pred_region
    _
  $region17: #{chebnet_forward.1} parent=0 // pred_fallthru
    _
  // Predicated region
  $region18: #{chebnet_forward.1} parent=0 // pred_check
    _
  $region19: #{chebnet_forward.1} parent=0 // pred_check_branch
    %20 = sbr.rel (0) target = $region21
  $region20: #{chebnet_forward.1} parent=0 // pred_region
    _
  $region21: #{chebnet_forward.1} parent=0 // pred_fallthru
    _
  // Predicated region
  $region22: #{chebnet_forward.1} parent=0 // pred_check
    _
  $region23: #{chebnet_forward.1} parent=0 // pred_check_branch
    %22 = sbr.rel (0) target = $region25
  $region24: #{chebnet_forward.1} parent=0 // pred_region
    _
  $region25: #{chebnet_forward.1} parent=0 // pred_fallthru
    _
  %v23 = vld [vmem:[%s0] sm:$0xff]
  %v24 = vld [vmem:[%s0 + $0x8] sm:$0xff]
  %v25 = vld [vmem:[%s0 + $0x10] sm:$0xff]
  %v26 = vld [vmem:[%s0 + $0x18] sm:$0xff]
  %v27 = vld [vmem:[%s0 + $0x20] sm:$0xff]
  %v28 = vld [vmem:[%s0 + $0x28] sm:$0xff]
  %v29 = vld [vmem:[%s0 + $0x30] sm:$0xff]
  %v30 = vld [vmem:[%s0 + $0x38] sm:$0xff]
  %v31 = vld [vmem:[%s0 + $0x40] sm:$0xff]
  %v32 = vld [vmem:[%s0 + $0x48] sm:$0xff]
  %v33 = vld [vmem:[%s0 + $0x50] sm:$0xff]
  %v34 = vld [vmem:[%s0 + $0x58] sm:$0xff]
  %v35 = vld [vmem:[%s0 + $0x60] sm:$0xff]
  %v36 = vld [vmem:[%s0 + $0x68] sm:$0xff]
  %v37 = vld [vmem:[%s0 + $0x70] sm:$0xff]
  %v38 = vld [vmem:[%s0 + $0x78] sm:$0xff]
  %v39 = vld [vmem:[%s1] sm:$0xff]
  %v40 = vld [vmem:[%s1 + $0x8] sm:$0xff]
  %v41 = vld [vmem:[%s1 + $0x10] sm:$0xff]
  %v42 = vld [vmem:[%s1 + $0x18] sm:$0xff]
  %v43 = vld [vmem:[%s1 + $0x20] sm:$0xff]
  %v44 = vld [vmem:[%s1 + $0x28] sm:$0xff]
  %v45 = vld [vmem:[%s1 + $0x30] sm:$0xff]
  %v46 = vld [vmem:[%s1 + $0x38] sm:$0xff]
  %v47 = vld [vmem:[%s1 + $0x40] sm:$0xff]
  %v48 = vld [vmem:[%s1 + $0x48] sm:$0xff]
  %v49 = vld [vmem:[%s1 + $0x50] sm:$0xff]
  %v50 = vld [vmem:[%s1 + $0x58] sm:$0xff]
  %v51 = vld [vmem:[%s1 + $0x60] sm:$0xff]
  %v52 = vld [vmem:[%s1 + $0x68] sm:$0xff]
  %v53 = vld [vmem:[%s1 + $0x70] sm:$0xff]
  %v54 = vld [vmem:[%s1 + $0x78] sm:$0xff]
  %v55 = vld [vmem:[%s2] sm:$0xff]
  %v56 = vld [vmem:[%s2 + $0x8] sm:$0xff]
  %v57 = vld [vmem:[%s2 + $0x10] sm:$0xff]
  %v58 = vld [vmem:[%s2 + $0x18] sm:$0xff]
  %v59 = vld [vmem:[%s2 + $0x20] sm:$0xff]
  %v60 = vld [vmem:[%s2 + $0x28] sm:$0xff]
  %v61 = vld [vmem:[%s2 + $0x30] sm:$0xff]
  %v62 = vld [vmem:[%s2 + $0x38] sm:$0xff]
  %v63 = vld [vmem:[%s2 + $0x40] sm:$0xff]
  %v64 = vld [vmem:[%s2 + $0x48] sm:$0xff]
  %v65 = vld [vmem:[%s2 + $0x50] sm:$0xff]
  %v66 = vld [vmem:[%s2 + $0x58] sm:$0xff]
  %v67 = vld [vmem:[%s2 + $0x60] sm:$0xff]
  %v68 = vld [vmem:[%s2 + $0x68] sm:$0xff]
  %v69 = vld [vmem:[%s2 + $0x70] sm:$0xff]
  %v70 = vld [vmem:[%s2 + $0x78] sm:$0xff]
  %71 = vmatprep.subr.mxu0 0.0
  %72 = vmatpush1.msra.mxu0 %v39
  %73 = vmatprep.subr.mxu0 0.0
  %74 = vmatpush1.msra.mxu0 %v40
  %75 = vmatprep.subr.mxu0 0.0
  %76 = vmatpush1.msra.mxu0 %v41
  %77 = vmatprep.subr.mxu0 0.0
  %78 = vmatpush1.msra.mxu0 %v42
  %79 = vmatprep.subr.mxu0 0.0
  %80 = vmatpush1.msra.mxu0 %v43
  %81 = vmatprep.subr.mxu0 0.0
  %82 = vmatpush1.msra.mxu0 %v44
  %83 = vmatprep.subr.mxu0 0.0
  %84 = vmatpush1.msra.mxu0 %v45
  %85 = vmatprep.subr.mxu0 0.0
  %86 = vmatpush1.msra.mxu0 %v46
  %87 = vmatprep.subr.mxu0 0.0
  %88 = vmatpush1.msra.mxu0 %v47
  %89 = vmatprep.subr.mxu0 0.0
  %90 = vmatpush1.msra.mxu0 %v48
  %91 = vmatprep.subr.mxu0 0.0
  %92 = vmatpush1.msra.mxu0 %v49
  %93 = vmatprep.subr.mxu0 0.0
  %94 = vmatpush1.msra.mxu0 %v50
  %95 = vmatprep.subr.mxu0 0.0
  %96 = vmatpush1.msra.mxu0 %v51
  %97 = vmatprep.subr.mxu0 0.0
  %98 = vmatpush1.msra.mxu0 %v52
  %99 = vmatprep.subr.mxu0 0.0
  %100 = vmatpush1.msra.mxu0 %v53
  %101 = vmatprep.subr.mxu0 0.0
  %102 = vmatpush1.msra.mxu0 %v54
  %103 = vmatprep.subr.mxu0 0.0
  %104 = vmatpush1.msra.mxu0 0.0
  %105 = vmatprep.subr.mxu0 0.0
  %106 = vmatpush1.msra.mxu0 0.0
  %107 = vmatprep.subr.mxu0 0.0
  %108 = vmatpush1.msra.mxu0 0.0
  %109 = vmatprep.subr.mxu0 0.0
  %110 = vmatpush1.msra.mxu0 0.0
  %111 = vmatprep.subr.mxu0 0.0
  %112 = vmatpush1.msra.mxu0 0.0
  %113 = vmatprep.subr.mxu0 0.0
  %114 = vmatpush1.msra.mxu0 0.0
  %115 = vmatprep.subr.mxu0 0.0
  %116 = vmatpush1.msra.mxu0 0.0
  %117 = vmatprep.subr.mxu0 0.0
  %118 = vmatpush1.msra.mxu0 0.0
  %119 = vmatprep.subr.mxu0 0.0
  %120 = vmatpush1.msra.mxu0 0.0
  %121 = vmatprep.subr.mxu0 0.0
  %122 = vmatpush1.msra.mxu0 0.0
  %123 = vmatprep.subr.mxu0 0.0
  %124 = vmatpush1.msra.mxu0 0.0
  %125 = vmatprep.subr.mxu0 0.0
  %126 = vmatpush1.msra.mxu0 0.0
  %127 = vmatprep.subr.mxu0 0.0
  %128 = vmatpush1.msra.mxu0 0.0
  %129 = vmatprep.subr.mxu0 0.0
  %130 = vmatpush1.msra.mxu0 0.0
  %131 = vmatprep.subr.mxu0 0.0
  %132 = vmatpush1.msra.mxu0 0.0
  %133 = vmatprep.subr.mxu0 0.0
  %134 = vmatpush1.msra.mxu0 0.0
  %135 = vmatprep.mubr.f32.mxu0 0.0
  %136 = vmatmul.mubr.f32.gmra.mrb[0].mxu0 %v23
  %v137 = vpop.f32.mrb[0].mxu0
  %v138 = vadd.f32 0.0, %v137
  %v139 = vpop.f32.mrb[0].mxu0
  %140 = vmatprep.mubr.f32.mxu0 0.0
  %141 = vmatmul.mubr.f32.gmra.mrb[0].mxu0 %v24
  %v142 = vpop.f32.mrb[0].mxu0
  %v143 = vadd.f32 0.0, %v142
  %v144 = vpop.f32.mrb[0].mxu0
  %145 = vmatprep.mubr.f32.mxu0 0.0
  %146 = vmatmul.mubr.f32.gmra.mrb[0].mxu0 %v25
  %v147 = vpop.f32.mrb[0].mxu0
  %v148 = vadd.f32 0.0, %v147
  %v149 = vpop.f32.mrb[0].mxu0
  %150 = vmatprep.mubr.f32.mxu0 0.0
  %151 = vmatmul.mubr.f32.gmra.mrb[0].mxu0 %v26
  %v152 = vpop.f32.mrb[0].mxu0
  %v153 = vadd.f32 0.0, %v152
  %v154 = vpop.f32.mrb[0].mxu0
  %155 = vmatprep.mubr.f32.mxu0 0.0
  %156 = vmatmul.mubr.f32.gmra.mrb[0].mxu0 %v27
  %v157 = vpop.f32.mrb[0].mxu0
  %v158 = vadd.f32 0.0, %v157
  %v159 = vpop.f32.mrb[0].mxu0
  %160 = vmatprep.mubr.f32.mxu0 0.0
  %161 = vmatmul.mubr.f32.gmra.mrb[0].mxu0 %v28
  %v162 = vpop.f32.mrb[0].mxu0
  %v163 = vadd.f32 0.0, %v162
  %v164 = vpop.f32.mrb[0].mxu0
  %165 = vmatprep.mubr.f32.mxu0 0.0
  %166 = vmatmul.mubr.f32.gmra.mrb[0].mxu0 %v29
  %v167 = vpop.f32.mrb[0].mxu0
  %v168 = vadd.f32 0.0, %v167
  %v169 = vpop.f32.mrb[0].mxu0
  %170 = vmatprep.mubr.f32.mxu0 0.0
  %171 = vmatmul.mubr.f32.gmra.mrb[0].mxu0 %v30
  %v172 = vpop.f32.mrb[0].mxu0
  %v173 = vadd.f32 0.0, %v172
  %v174 = vpop.f32.mrb[0].mxu0
  %175 = vmatprep.mubr.f32.mxu0 0.0
  %176 = vmatmul.mubr.f32.gmra.mrb[0].mxu0 %v31
  %v177 = vpop.f32.mrb[0].mxu0
  %v178 = vadd.f32 0.0, %v177
  %v179 = vpop.f32.mrb[0].mxu0
  %180 = vmatprep.mubr.f32.mxu0 0.0
  %181 = vmatmul.mubr.f32.gmra.mrb[0].mxu0 %v32
  %v182 = vpop.f32.mrb[0].mxu0
  %v183 = vadd.f32 0.0, %v182
  %v184 = vpop.f32.mrb[0].mxu0
  %185 = vmatprep.mubr.f32.mxu0 0.0
  %186 = vmatmul.mubr.f32.gmra.mrb[0].mxu0 %v33
  %v187 = vpop.f32.mrb[0].mxu0
  %v188 = vadd.f32 0.0, %v187
  %v189 = vpop.f32.mrb[0].mxu0
  %190 = vmatprep.mubr.f32.mxu0 0.0
  %191 = vmatmul.mubr.f32.gmra.mrb[0].mxu0 %v34
  %v192 = vpop.f32.mrb[0].mxu0
  %v193 = vadd.f32 0.0, %v192
  %v194 = vpop.f32.mrb[0].mxu0
  %195 = vmatprep.mubr.f32.mxu0 0.0
  %196 = vmatmul.mubr.f32.gmra.mrb[0].mxu0 %v35
  %v197 = vpop.f32.mrb[0].mxu0
  %v198 = vadd.f32 0.0, %v197
  %v199 = vpop.f32.mrb[0].mxu0
  %200 = vmatprep.mubr.f32.mxu0 0.0
  %201 = vmatmul.mubr.f32.gmra.mrb[0].mxu0 %v36
  %v202 = vpop.f32.mrb[0].mxu0
  %v203 = vadd.f32 0.0, %v202
  %v204 = vpop.f32.mrb[0].mxu0
  %205 = vmatprep.mubr.f32.mxu0 0.0
  %206 = vmatmul.mubr.f32.gmra.mrb[0].mxu0 %v37
  %v207 = vpop.f32.mrb[0].mxu0
  %v208 = vadd.f32 0.0, %v207
  %v209 = vpop.f32.mrb[0].mxu0
  %210 = vmatprep.mubr.f32.mxu0 0.0
  %211 = vmatmul.mubr.f32.gmra.mrb[0].mxu0 %v38
  %v212 = vpop.f32.mrb[0].mxu0
  %v213 = vadd.f32 0.0, %v212
  %v214 = vpop.f32.mrb[0].mxu0
  %215 = vdwg.mxu0
  %s216 = scalar_lea.vmem %s2, 128
  %v217 = vld [vmem:[%s216] sm:$0xff]
  %v218 = vld [vmem:[%s216 + $0x8] sm:$0xff]
  %v219 = vld [vmem:[%s216 + $0x10] sm:$0xff]
  %v220 = vld [vmem:[%s216 + $0x18] sm:$0xff]
  %v221 = vld [vmem:[%s216 + $0x20] sm:$0xff]
  %v222 = vld [vmem:[%s216 + $0x28] sm:$0xff]
  %v223 = vld [vmem:[%s216 + $0x30] sm:$0xff]
  %v224 = vld [vmem:[%s216 + $0x38] sm:$0xff]
  %v225 = vld [vmem:[%s216 + $0x40] sm:$0xff]
  %v226 = vld [vmem:[%s216 + $0x48] sm:$0xff]
  %v227 = vld [vmem:[%s216 + $0x50] sm:$0xff]
  %v228 = vld [vmem:[%s216 + $0x58] sm:$0xff]
  %v229 = vld [vmem:[%s216 + $0x60] sm:$0xff]
  %v230 = vld [vmem:[%s216 + $0x68] sm:$0xff]
  %v231 = vld [vmem:[%s216 + $0x70] sm:$0xff]
  %v232 = vld [vmem:[%s216 + $0x78] sm:$0xff]
  %233 = vmatprep.subr.mxu0 0.0
  %234 = vmatpush1.msra.mxu0 %v217
  %235 = vmatprep.subr.mxu0 0.0
  %236 = vmatpush1.msra.mxu0 %v218
  %237 = vmatprep.subr.mxu0 0.0
  %238 = vmatpush1.msra.mxu0 %v219
  %239 = vmatprep.subr.mxu0 0.0
  %240 = vmatpush1.msra.mxu0 %v220
  %241 = vmatprep.subr.mxu0 0.0
  %242 = vmatpush1.msra.mxu0 %v221
  %243 = vmatprep.subr.mxu0 0.0
  %244 = vmatpush1.msra.mxu0 %v222
  %245 = vmatprep.subr.mxu0 0.0
  %246 = vmatpush1.msra.mxu0 %v223
  %247 = vmatprep.subr.mxu0 0.0
  %248 = vmatpush1.msra.mxu0 %v224
  %249 = vmatprep.subr.mxu0 0.0
  %250 = vmatpush1.msra.mxu0 %v225
  %251 = vmatprep.subr.mxu0 0.0
  %252 = vmatpush1.msra.mxu0 %v226
  %253 = vmatprep.subr.mxu0 0.0
  %254 = vmatpush1.msra.mxu0 %v227
  %255 = vmatprep.subr.mxu0 0.0
  %256 = vmatpush1.msra.mxu0 %v228
  %257 = vmatprep.subr.mxu0 0.0
  %258 = vmatpush1.msra.mxu0 %v229
  %259 = vmatprep.subr.mxu0 0.0
  %260 = vmatpush1.msra.mxu0 %v230
  %261 = vmatprep.subr.mxu0 0.0
  %262 = vmatpush1.msra.mxu0 %v231
  %263 = vmatprep.subr.mxu0 0.0
  %264 = vmatpush1.msra.mxu0 %v232
  %265 = vmatprep.subr.mxu0 0.0
  %266 = vmatpush1.msra.mxu0 0.0
  %267 = vmatprep.subr.mxu0 0.0
  %268 = vmatpush1.msra.mxu0 0.0
  %269 = vmatprep.subr.mxu0 0.0
  %270 = vmatpush1.msra.mxu0 0.0
  %271 = vmatprep.subr.mxu0 0.0
  %272 = vmatpush1.msra.mxu0 0.0
  %273 = vmatprep.subr.mxu0 0.0
  %274 = vmatpush1.msra.mxu0 0.0
  %275 = vmatprep.subr.mxu0 0.0
  %276 = vmatpush1.msra.mxu0 0.0
  %277 = vmatprep.subr.mxu0 0.0
  %278 = vmatpush1.msra.mxu0 0.0
  %279 = vmatprep.subr.mxu0 0.0
  %280 = vmatpush1.msra.mxu0 0.0
  %281 = vmatprep.subr.mxu0 0.0
  %282 = vmatpush1.msra.mxu0 0.0
  %283 = vmatprep.subr.mxu0 0.0
  %284 = vmatpush1.msra.mxu0 0.0
  %285 = vmatprep.subr.mxu0 0.0
  %286 = vmatpush1.msra.mxu0 0.0
  %287 = vmatprep.subr.mxu0 0.0
  %288 = vmatpush1.msra.mxu0 0.0
  %289 = vmatprep.subr.mxu0 0.0
  %290 = vmatpush1.msra.mxu0 0.0
  %291 = vmatprep.subr.mxu0 0.0
  %292 = vmatpush1.msra.mxu0 0.0
  %293 = vmatprep.subr.mxu0 0.0
  %294 = vmatpush1.msra.mxu0 0.0
  %295 = vmatprep.subr.mxu0 0.0
  %296 = vmatpush1.msra.mxu0 0.0
  %297 = vmatprep.mubr.f32.mxu0 0.0
  %298 = vmatmul.mubr.f32.gmra.mrb[0].mxu0 %v138
  %v299 = vpop.f32.mrb[0].mxu0
  %v300 = vadd.f32 0.0, %v299
  %v301 = vpop.f32.mrb[0].mxu0
  %302 = vmatprep.mubr.f32.mxu0 0.0
  %303 = vmatmul.mubr.f32.gmra.mrb[0].mxu0 %v143
  %v304 = vpop.f32.mrb[0].mxu0
  %v305 = vadd.f32 0.0, %v304
  %v306 = vpop.f32.mrb[0].mxu0
  %307 = vmatprep.mubr.f32.mxu0 0.0
  %308 = vmatmul.mubr.f32.gmra.mrb[0].mxu0 %v148
  %v309 = vpop.f32.mrb[0].mxu0
  %v310 = vadd.f32 0.0, %v309
  %v311 = vpop.f32.mrb[0].mxu0
  %312 = vmatprep.mubr.f32.mxu0 0.0
  %313 = vmatmul.mubr.f32.gmra.mrb[0].mxu0 %v153
  %v314 = vpop.f32.mrb[0].mxu0
  %v315 = vadd.f32 0.0, %v314
  %v316 = vpop.f32.mrb[0].mxu0
  %317 = vmatprep.mubr.f32.mxu0 0.0
  %318 = vmatmul.mubr.f32.gmra.mrb[0].mxu0 %v158
  %v319 = vpop.f32.mrb[0].mxu0
  %v320 = vadd.f32 0.0, %v319
  %v321 = vpop.f32.mrb[0].mxu0
  %322 = vmatprep.mubr.f32.mxu0 0.0
  %323 = vmatmul.mubr.f32.gmra.mrb[0].mxu0 %v163
  %v324 = vpop.f32.mrb[0].mxu0
  %v325 = vadd.f32 0.0, %v324
  %v326 = vpop.f32.mrb[0].mxu0
  %327 = vmatprep.mubr.f32.mxu0 0.0
  %328 = vmatmul.mubr.f32.gmra.mrb[0].mxu0 %v168
  %v329 = vpop.f32.mrb[0].mxu0
  %v330 = vadd.f32 0.0, %v329
  %v331 = vpop.f32.mrb[0].mxu0
  %332 = vmatprep.mubr.f32.mxu0 0.0
  %333 = vmatmul.mubr.f32.gmra.mrb[0].mxu0 %v173
  %v334 = vpop.f32.mrb[0].mxu0
  %v335 = vadd.f32 0.0, %v334
  %v336 = vpop.f32.mrb[0].mxu0
  %337 = vmatprep.mubr.f32.mxu0 0.0
  %338 = vmatmul.mubr.f32.gmra.mrb[0].mxu0 %v178
  %v339 = vpop.f32.mrb[0].mxu0
  %v340 = vadd.f32 0.0, %v339
  %v341 = vpop.f32.mrb[0].mxu0
  %342 = vmatprep.mubr.f32.mxu0 0.0
  %343 = vmatmul.mubr.f32.gmra.mrb[0].mxu0 %v183
  %v344 = vpop.f32.mrb[0].mxu0
  %v345 = vadd.f32 0.0, %v344
  %v346 = vpop.f32.mrb[0].mxu0
  %347 = vmatprep.mubr.f32.mxu0 0.0
  %348 = vmatmul.mubr.f32.gmra.mrb[0].mxu0 %v188
  %v349 = vpop.f32.mrb[0].mxu0
  %v350 = vadd.f32 0.0, %v349
  %v351 = vpop.f32.mrb[0].mxu0
  %352 = vmatprep.mubr.f32.mxu0 0.0
  %353 = vmatmul.mubr.f32.gmra.mrb[0].mxu0 %v193
  %v354 = vpop.f32.mrb[0].mxu0
  %v355 = vadd.f32 0.0, %v354
  %v356 = vpop.f32.mrb[0].mxu0
  %357 = vmatprep.mubr.f32.mxu0 0.0
  %358 = vmatmul.mubr.f32.gmra.mrb[0].mxu0 %v198
  %v359 = vpop.f32.mrb[0].mxu0
  %v360 = vadd.f32 0.0, %v359
  %v361 = vpop.f32.mrb[0].mxu0
  %362 = vmatprep.mubr.f32.mxu0 0.0
  %363 = vmatmul.mubr.f32.gmra.mrb[0].mxu0 %v203
  %v364 = vpop.f32.mrb[0].mxu0
  %v365 = vadd.f32 0.0, %v364
  %v366 = vpop.f32.mrb[0].mxu0
  %367 = vmatprep.mubr.f32.mxu0 0.0
  %368 = vmatmul.mubr.f32.gmra.mrb[0].mxu0 %v208
  %v369 = vpop.f32.mrb[0].mxu0
  %v370 = vadd.f32 0.0, %v369
  %v371 = vpop.f32.mrb[0].mxu0
  %372 = vmatprep.mubr.f32.mxu0 0.0
  %373 = vmatmul.mubr.f32.gmra.mrb[0].mxu0 %v213
  %v374 = vpop.f32.mrb[0].mxu0
  %v375 = vadd.f32 0.0, %v374
  %v376 = vpop.f32.mrb[0].mxu0
  %377 = vdwg.mxu0
  %378 = vmatprep.subr.mxu0 0.0
  %379 = vmatpush1.msra.mxu0 %v55
  %380 = vmatprep.subr.mxu0 0.0
  %381 = vmatpush1.msra.mxu0 %v56
  %382 = vmatprep.subr.mxu0 0.0
  %383 = vmatpush1.msra.mxu0 %v57
  %384 = vmatprep.subr.mxu0 0.0
  %385 = vmatpush1.msra.mxu0 %v58
  %386 = vmatprep.subr.mxu0 0.0
  %387 = vmatpush1.msra.mxu0 %v59
  %388 = vmatprep.subr.mxu0 0.0
  %389 = vmatpush1.msra.mxu0 %v60
  %390 = vmatprep.subr.mxu0 0.0
  %391 = vmatpush1.msra.mxu0 %v61
  %392 = vmatprep.subr.mxu0 0.0
  %393 = vmatpush1.msra.mxu0 %v62
  %394 = vmatprep.subr.mxu0 0.0
  %395 = vmatpush1.msra.mxu0 %v63
  %396 = vmatprep.subr.mxu0 0.0
  %397 = vmatpush1.msra.mxu0 %v64
  %398 = vmatprep.subr.mxu0 0.0
  %399 = vmatpush1.msra.mxu0 %v65
  %400 = vmatprep.subr.mxu0 0.0
  %401 = vmatpush1.msra.mxu0 %v66
  %402 = vmatprep.subr.mxu0 0.0
  %403 = vmatpush1.msra.mxu0 %v67
  %404 = vmatprep.subr.mxu0 0.0
  %405 = vmatpush1.msra.mxu0 %v68
  %406 = vmatprep.subr.mxu0 0.0
  %407 = vmatpush1.msra.mxu0 %v69
  %408 = vmatprep.subr.mxu0 0.0
  %409 = vmatpush1.msra.mxu0 %v70
  %410 = vmatprep.subr.mxu0 0.0
  %411 = vmatpush1.msra.mxu0 0.0
  %412 = vmatprep.subr.mxu0 0.0
  %413 = vmatpush1.msra.mxu0 0.0
  %414 = vmatprep.subr.mxu0 0.0
  %415 = vmatpush1.msra.mxu0 0.0
  %416 = vmatprep.subr.mxu0 0.0
  %417 = vmatpush1.msra.mxu0 0.0
  %418 = vmatprep.subr.mxu0 0.0
  %419 = vmatpush1.msra.mxu0 0.0
  %420 = vmatprep.subr.mxu0 0.0
  %421 = vmatpush1.msra.mxu0 0.0
  %422 = vmatprep.subr.mxu0 0.0
  %423 = vmatpush1.msra.mxu0 0.0
  %424 = vmatprep.subr.mxu0 0.0
  %425 = vmatpush1.msra.mxu0 0.0
  %426 = vmatprep.subr.mxu0 0.0
  %427 = vmatpush1.msra.mxu0 0.0
  %428 = vmatprep.subr.mxu0 0.0
  %429 = vmatpush1.msra.mxu0 0.0
  %430 = vmatprep.subr.mxu0 0.0
  %431 = vmatpush1.msra.mxu0 0.0
  %432 = vmatprep.subr.mxu0 0.0
  %433 = vmatpush1.msra.mxu0 0.0
  %434 = vmatprep.subr.mxu0 0.0
  %435 = vmatpush1.msra.mxu0 0.0
  %436 = vmatprep.subr.mxu0 0.0
  %437 = vmatpush1.msra.mxu0 0.0
  %438 = vmatprep.subr.mxu0 0.0
  %439 = vmatpush1.msra.mxu0 0.0
  %440 = vmatprep.subr.mxu0 0.0
  %441 = vmatpush1.msra.mxu0 0.0
  %442 = vmatprep.mubr.f32.mxu0 0.0
  %443 = vmatmul.mubr.f32.gmra.mrb[0].mxu0 %v39
  %v444 = vpop.f32.mrb[0].mxu0
  %v445 = vadd.f32 %v300, %v444
  %v446 = vpop.f32.mrb[0].mxu0
  %447 = vmatprep.mubr.f32.mxu0 0.0
  %448 = vmatmul.mubr.f32.gmra.mrb[0].mxu0 %v40
  %v449 = vpop.f32.mrb[0].mxu0
  %v450 = vadd.f32 %v305, %v449
  %v451 = vpop.f32.mrb[0].mxu0
  %452 = vmatprep.mubr.f32.mxu0 0.0
  %453 = vmatmul.mubr.f32.gmra.mrb[0].mxu0 %v41
  %v454 = vpop.f32.mrb[0].mxu0
  %v455 = vadd.f32 %v310, %v454
  %v456 = vpop.f32.mrb[0].mxu0
  %457 = vmatprep.mubr.f32.mxu0 0.0
  %458 = vmatmul.mubr.f32.gmra.mrb[0].mxu0 %v42
  %v459 = vpop.f32.mrb[0].mxu0
  %v460 = vadd.f32 %v315, %v459
  %v461 = vpop.f32.mrb[0].mxu0
  %462 = vmatprep.mubr.f32.mxu0 0.0
  %463 = vmatmul.mubr.f32.gmra.mrb[0].mxu0 %v43
  %v464 = vpop.f32.mrb[0].mxu0
  %v465 = vadd.f32 %v320, %v464
  %v466 = vpop.f32.mrb[0].mxu0
  %467 = vmatprep.mubr.f32.mxu0 0.0
  %468 = vmatmul.mubr.f32.gmra.mrb[0].mxu0 %v44
  %v469 = vpop.f32.mrb[0].mxu0
  %v470 = vadd.f32 %v325, %v469
  %v471 = vpop.f32.mrb[0].mxu0
  %472 = vmatprep.mubr.f32.mxu0 0.0
  %473 = vmatmul.mubr.f32.gmra.mrb[0].mxu0 %v45
  %v474 = vpop.f32.mrb[0].mxu0
  %v475 = vadd.f32 %v330, %v474
  %v476 = vpop.f32.mrb[0].mxu0
  %477 = vmatprep.mubr.f32.mxu0 0.0
  %478 = vmatmul.mubr.f32.gmra.mrb[0].mxu0 %v46
  %v479 = vpop.f32.mrb[0].mxu0
  %v480 = vadd.f32 %v335, %v479
  %v481 = vpop.f32.mrb[0].mxu0
  %482 = vmatprep.mubr.f32.mxu0 0.0
  %483 = vmatmul.mubr.f32.gmra.mrb[0].mxu0 %v47
  %v484 = vpop.f32.mrb[0].mxu0
  %v485 = vadd.f32 %v340, %v484
  %v486 = vpop.f32.mrb[0].mxu0
  %487 = vmatprep.mubr.f32.mxu0 0.0
  %488 = vmatmul.mubr.f32.gmra.mrb[0].mxu0 %v48
  %v489 = vpop.f32.mrb[0].mxu0
  %v490 = vadd.f32 %v345, %v489
  %v491 = vpop.f32.mrb[0].mxu0
  %492 = vmatprep.mubr.f32.mxu0 0.0
  %493 = vmatmul.mubr.f32.gmra.mrb[0].mxu0 %v49
  %v494 = vpop.f32.mrb[0].mxu0
  %v495 = vadd.f32 %v350, %v494
  %v496 = vpop.f32.mrb[0].mxu0
  %497 = vmatprep.mubr.f32.mxu0 0.0
  %498 = vmatmul.mubr.f32.gmra.mrb[0].mxu0 %v50
  %v499 = vpop.f32.mrb[0].mxu0
  %v500 = vadd.f32 %v355, %v499
  %v501 = vpop.f32.mrb[0].mxu0
  %502 = vmatprep.mubr.f32.mxu0 0.0
  %503 = vmatmul.mubr.f32.gmra.mrb[0].mxu0 %v51
  %v504 = vpop.f32.mrb[0].mxu0
  %v505 = vadd.f32 %v360, %v504
  %v506 = vpop.f32.mrb[0].mxu0
  %507 = vmatprep.mubr.f32.mxu0 0.0
  %508 = vmatmul.mubr.f32.gmra.mrb[0].mxu0 %v52
  %v509 = vpop.f32.mrb[0].mxu0
  %v510 = vadd.f32 %v365, %v509
  %v511 = vpop.f32.mrb[0].mxu0
  %512 = vmatprep.mubr.f32.mxu0 0.0
  %513 = vmatmul.mubr.f32.gmra.mrb[0].mxu0 %v53
  %v514 = vpop.f32.mrb[0].mxu0
  %v515 = vadd.f32 %v370, %v514
  %v516 = vpop.f32.mrb[0].mxu0
  %517 = vmatprep.mubr.f32.mxu0 0.0
  %518 = vmatmul.mubr.f32.gmra.mrb[0].mxu0 %v54
  %v519 = vpop.f32.mrb[0].mxu0
  %v520 = vadd.f32 %v375, %v519
  %v521 = vpop.f32.mrb[0].mxu0
  %522 = vdwg.mxu0
  %523 = vmatprep.subr.mxu0 0.0
  %524 = vmatpush1.msra.mxu0 %v138
  %525 = vmatprep.subr.mxu0 0.0
  %526 = vmatpush1.msra.mxu0 %v143
  %527 = vmatprep.subr.mxu0 0.0
  %528 = vmatpush1.msra.mxu0 %v148
  %529 = vmatprep.subr.mxu0 0.0
  %530 = vmatpush1.msra.mxu0 %v153
  %531 = vmatprep.subr.mxu0 0.0
  %532 = vmatpush1.msra.mxu0 %v158
  %533 = vmatprep.subr.mxu0 0.0
  %534 = vmatpush1.msra.mxu0 %v163
  %535 = vmatprep.subr.mxu0 0.0
  %536 = vmatpush1.msra.mxu0 %v168
  %537 = vmatprep.subr.mxu0 0.0
  %538 = vmatpush1.msra.mxu0 %v173
  %539 = vmatprep.subr.mxu0 0.0
  %540 = vmatpush1.msra.mxu0 %v178
  %541 = vmatprep.subr.mxu0 0.0
  %542 = vmatpush1.msra.mxu0 %v183
  %543 = vmatprep.subr.mxu0 0.0
  %544 = vmatpush1.msra.mxu0 %v188
  %545 = vmatprep.subr.mxu0 0.0
  %546 = vmatpush1.msra.mxu0 %v193
  %547 = vmatprep.subr.mxu0 0.0
  %548 = vmatpush1.msra.mxu0 %v198
  %549 = vmatprep.subr.mxu0 0.0
  %550 = vmatpush1.msra.mxu0 %v203
  %551 = vmatprep.subr.mxu0 0.0
  %552 = vmatpush1.msra.mxu0 %v208
  %553 = vmatprep.subr.mxu0 0.0
  %554 = vmatpush1.msra.mxu0 %v213
  %555 = vmatprep.subr.mxu0 0.0
  %556 = vmatpush1.msra.mxu0 0.0
  %557 = vmatprep.subr.mxu0 0.0
  %558 = vmatpush1.msra.mxu0 0.0
  %559 = vmatprep.subr.mxu0 0.0
  %560 = vmatpush1.msra.mxu0 0.0
  %561 = vmatprep.subr.mxu0 0.0
  %562 = vmatpush1.msra.mxu0 0.0
  %563 = vmatprep.subr.mxu0 0.0
  %564 = vmatpush1.msra.mxu0 0.0
  %565 = vmatprep.subr.mxu0 0.0
  %566 = vmatpush1.msra.mxu0 0.0
  %567 = vmatprep.subr.mxu0 0.0
  %568 = vmatpush1.msra.mxu0 0.0
  %569 = vmatprep.subr.mxu0 0.0
  %570 = vmatpush1.msra.mxu0 0.0
  %571 = vmatprep.subr.mxu0 0.0
  %572 = vmatpush1.msra.mxu0 0.0
  %573 = vmatprep.subr.mxu0 0.0
  %574 = vmatpush1.msra.mxu0 0.0
  %575 = vmatprep.subr.mxu0 0.0
  %576 = vmatpush1.msra.mxu0 0.0
  %577 = vmatprep.subr.mxu0 0.0
  %578 = vmatpush1.msra.mxu0 0.0
  %579 = vmatprep.subr.mxu0 0.0
  %580 = vmatpush1.msra.mxu0 0.0
  %581 = vmatprep.subr.mxu0 0.0
  %582 = vmatpush1.msra.mxu0 0.0
  %583 = vmatprep.subr.mxu0 0.0
  %584 = vmatpush1.msra.mxu0 0.0
  %585 = vmatprep.subr.mxu0 0.0
  %586 = vmatpush1.msra.mxu0 0.0
  %587 = vmatprep.mubr.f32.mxu0 0.0
  %588 = vmatmul.mubr.f32.gmra.mrb[0].mxu0 %v23
  %v589 = vpop.f32.mrb[0].mxu0
  %v590 = vadd.f32 0.0, %v589
  %v591 = vpop.f32.mrb[0].mxu0
  %592 = vmatprep.mubr.f32.mxu0 0.0
  %593 = vmatmul.mubr.f32.gmra.mrb[0].mxu0 %v24
  %v594 = vpop.f32.mrb[0].mxu0
  %v595 = vadd.f32 0.0, %v594
  %v596 = vpop.f32.mrb[0].mxu0
  %597 = vmatprep.mubr.f32.mxu0 0.0
  %598 = vmatmul.mubr.f32.gmra.mrb[0].mxu0 %v25
  %v599 = vpop.f32.mrb[0].mxu0
  %v600 = vadd.f32 0.0, %v599
  %v601 = vpop.f32.mrb[0].mxu0
  %602 = vmatprep.mubr.f32.mxu0 0.0
  %603 = vmatmul.mubr.f32.gmra.mrb[0].mxu0 %v26
  %v604 = vpop.f32.mrb[0].mxu0
  %v605 = vadd.f32 0.0, %v604
  %v606 = vpop.f32.mrb[0].mxu0
  %607 = vmatprep.mubr.f32.mxu0 0.0
  %608 = vmatmul.mubr.f32.gmra.mrb[0].mxu0 %v27
  %v609 = vpop.f32.mrb[0].mxu0
  %v610 = vadd.f32 0.0, %v609
  %v611 = vpop.f32.mrb[0].mxu0
  %612 = vmatprep.mubr.f32.mxu0 0.0
  %613 = vmatmul.mubr.f32.gmra.mrb[0].mxu0 %v28
  %v614 = vpop.f32.mrb[0].mxu0
  %v615 = vadd.f32 0.0, %v614
  %v616 = vpop.f32.mrb[0].mxu0
  %617 = vmatprep.mubr.f32.mxu0 0.0
  %618 = vmatmul.mubr.f32.gmra.mrb[0].mxu0 %v29
  %v619 = vpop.f32.mrb[0].mxu0
  %v620 = vadd.f32 0.0, %v619
  %v621 = vpop.f32.mrb[0].mxu0
  %622 = vmatprep.mubr.f32.mxu0 0.0
  %623 = vmatmul.mubr.f32.gmra.mrb[0].mxu0 %v30
  %v624 = vpop.f32.mrb[0].mxu0
  %v625 = vadd.f32 0.0, %v624
  %v626 = vpop.f32.mrb[0].mxu0
  %627 = vmatprep.mubr.f32.mxu0 0.0
  %628 = vmatmul.mubr.f32.gmra.mrb[0].mxu0 %v31
  %v629 = vpop.f32.mrb[0].mxu0
  %v630 = vadd.f32 0.0, %v629
  %v631 = vpop.f32.mrb[0].mxu0
  %632 = vmatprep.mubr.f32.mxu0 0.0
  %633 = vmatmul.mubr.f32.gmra.mrb[0].mxu0 %v32
  %v634 = vpop.f32.mrb[0].mxu0
  %v635 = vadd.f32 0.0, %v634
  %v636 = vpop.f32.mrb[0].mxu0
  %637 = vmatprep.mubr.f32.mxu0 0.0
  %638 = vmatmul.mubr.f32.gmra.mrb[0].mxu0 %v33
  %v639 = vpop.f32.mrb[0].mxu0
  %v640 = vadd.f32 0.0, %v639
  %v641 = vpop.f32.mrb[0].mxu0
  %642 = vmatprep.mubr.f32.mxu0 0.0
  %643 = vmatmul.mubr.f32.gmra.mrb[0].mxu0 %v34
  %v644 = vpop.f32.mrb[0].mxu0
  %v645 = vadd.f32 0.0, %v644
  %v646 = vpop.f32.mrb[0].mxu0
  %647 = vmatprep.mubr.f32.mxu0 0.0
  %648 = vmatmul.mubr.f32.gmra.mrb[0].mxu0 %v35
  %v649 = vpop.f32.mrb[0].mxu0
  %v650 = vadd.f32 0.0, %v649
  %v651 = vpop.f32.mrb[0].mxu0
  %652 = vmatprep.mubr.f32.mxu0 0.0
  %653 = vmatmul.mubr.f32.gmra.mrb[0].mxu0 %v36
  %v654 = vpop.f32.mrb[0].mxu0
  %v655 = vadd.f32 0.0, %v654
  %v656 = vpop.f32.mrb[0].mxu0
  %657 = vmatprep.mubr.f32.mxu0 0.0
  %658 = vmatmul.mubr.f32.gmra.mrb[0].mxu0 %v37
  %v659 = vpop.f32.mrb[0].mxu0
  %v660 = vadd.f32 0.0, %v659
  %v661 = vpop.f32.mrb[0].mxu0
  %662 = vmatprep.mubr.f32.mxu0 0.0
  %663 = vmatmul.mubr.f32.gmra.mrb[0].mxu0 %v38
  %v664 = vpop.f32.mrb[0].mxu0
  %v665 = vadd.f32 0.0, %v664
  %v666 = vpop.f32.mrb[0].mxu0
  %667 = vdwg.mxu0
  %v668 = vmul.f32 %v590, 2.0
  %v669 = vmul.f32 %v595, 2.0
  %v670 = vmul.f32 %v600, 2.0
  %v671 = vmul.f32 %v605, 2.0
  %v672 = vmul.f32 %v610, 2.0
  %v673 = vmul.f32 %v615, 2.0
  %v674 = vmul.f32 %v620, 2.0
  %v675 = vmul.f32 %v625, 2.0
  %v676 = vmul.f32 %v630, 2.0
  %v677 = vmul.f32 %v635, 2.0
  %v678 = vmul.f32 %v640, 2.0
  %v679 = vmul.f32 %v645, 2.0
  %v680 = vmul.f32 %v650, 2.0
  %v681 = vmul.f32 %v655, 2.0
  %v682 = vmul.f32 %v660, 2.0
  %v683 = vmul.f32 %v665, 2.0
  %v684 = vsub.f32 %v668, %v39
  %v685 = vsub.f32 %v669, %v40
  %v686 = vsub.f32 %v670, %v41
  %v687 = vsub.f32 %v671, %v42
  %v688 = vsub.f32 %v672, %v43
  %v689 = vsub.f32 %v673, %v44
  %v690 = vsub.f32 %v674, %v45
  %v691 = vsub.f32 %v675, %v46
  %v692 = vsub.f32 %v676, %v47
  %v693 = vsub.f32 %v677, %v48
  %v694 = vsub.f32 %v678, %v49
  %v695 = vsub.f32 %v679, %v50
  %v696 = vsub.f32 %v680, %v51
  %v697 = vsub.f32 %v681, %v52
  %v698 = vsub.f32 %v682, %v53
  %v699 = vsub.f32 %v683, %v54
  %s700 = scalar_lea.vmem %s2, 256
  %v701 = vld [vmem:[%s700] sm:$0xff]
  %v702 = vld [vmem:[%s700 + $0x8] sm:$0xff]
  %v703 = vld [vmem:[%s700 + $0x10] sm:$0xff]
  %v704 = vld [vmem:[%s700 + $0x18] sm:$0xff]
  %v705 = vld [vmem:[%s700 + $0x20] sm:$0xff]
  %v706 = vld [vmem:[%s700 + $0x28] sm:$0xff]
  %v707 = vld [vmem:[%s700 + $0x30] sm:$0xff]
  %v708 = vld [vmem:[%s700 + $0x38] sm:$0xff]
  %v709 = vld [vmem:[%s700 + $0x40] sm:$0xff]
  %v710 = vld [vmem:[%s700 + $0x48] sm:$0xff]
  %v711 = vld [vmem:[%s700 + $0x50] sm:$0xff]
  %v712 = vld [vmem:[%s700 + $0x58] sm:$0xff]
  %v713 = vld [vmem:[%s700 + $0x60] sm:$0xff]
  %v714 = vld [vmem:[%s700 + $0x68] sm:$0xff]
  %v715 = vld [vmem:[%s700 + $0x70] sm:$0xff]
  %v716 = vld [vmem:[%s700 + $0x78] sm:$0xff]
  %717 = vmatprep.subr.mxu0 0.0
  %718 = vmatpush1.msra.mxu0 %v701
  %719 = vmatprep.subr.mxu0 0.0
  %720 = vmatpush1.msra.mxu0 %v702
  %721 = vmatprep.subr.mxu0 0.0
  %722 = vmatpush1.msra.mxu0 %v703
  %723 = vmatprep.subr.mxu0 0.0
  %724 = vmatpush1.msra.mxu0 %v704
  %725 = vmatprep.subr.mxu0 0.0
  %726 = vmatpush1.msra.mxu0 %v705
  %727 = vmatprep.subr.mxu0 0.0
  %728 = vmatpush1.msra.mxu0 %v706
  %729 = vmatprep.subr.mxu0 0.0
  %730 = vmatpush1.msra.mxu0 %v707
  %731 = vmatprep.subr.mxu0 0.0
  %732 = vmatpush1.msra.mxu0 %v708
  %733 = vmatprep.subr.mxu0 0.0
  %734 = vmatpush1.msra.mxu0 %v709
  %735 = vmatprep.subr.mxu0 0.0
  %736 = vmatpush1.msra.mxu0 %v710
  %737 = vmatprep.subr.mxu0 0.0
  %738 = vmatpush1.msra.mxu0 %v711
  %739 = vmatprep.subr.mxu0 0.0
  %740 = vmatpush1.msra.mxu0 %v712
  %741 = vmatprep.subr.mxu0 0.0
  %742 = vmatpush1.msra.mxu0 %v713
  %743 = vmatprep.subr.mxu0 0.0
  %744 = vmatpush1.msra.mxu0 %v714
  %745 = vmatprep.subr.mxu0 0.0
  %746 = vmatpush1.msra.mxu0 %v715
  %747 = vmatprep.subr.mxu0 0.0
  %748 = vmatpush1.msra.mxu0 %v716
  %749 = vmatprep.subr.mxu0 0.0
  %750 = vmatpush1.msra.mxu0 0.0
  %751 = vmatprep.subr.mxu0 0.0
  %752 = vmatpush1.msra.mxu0 0.0
  %753 = vmatprep.subr.mxu0 0.0
  %754 = vmatpush1.msra.mxu0 0.0
  %755 = vmatprep.subr.mxu0 0.0
  %756 = vmatpush1.msra.mxu0 0.0
  %757 = vmatprep.subr.mxu0 0.0
  %758 = vmatpush1.msra.mxu0 0.0
  %759 = vmatprep.subr.mxu0 0.0
  %760 = vmatpush1.msra.mxu0 0.0
  %761 = vmatprep.subr.mxu0 0.0
  %762 = vmatpush1.msra.mxu0 0.0
  %763 = vmatprep.subr.mxu0 0.0
  %764 = vmatpush1.msra.mxu0 0.0
  %765 = vmatprep.subr.mxu0 0.0
  %766 = vmatpush1.msra.mxu0 0.0
  %767 = vmatprep.subr.mxu0 0.0
  %768 = vmatpush1.msra.mxu0 0.0
  %769 = vmatprep.subr.mxu0 0.0
  %770 = vmatpush1.msra.mxu0 0.0
  %771 = vmatprep.subr.mxu0 0.0
  %772 = vmatpush1.msra.mxu0 0.0
  %773 = vmatprep.subr.mxu0 0.0
  %774 = vmatpush1.msra.mxu0 0.0
  %775 = vmatprep.subr.mxu0 0.0
  %776 = vmatpush1.msra.mxu0 0.0
  %777 = vmatprep.subr.mxu0 0.0
  %778 = vmatpush1.msra.mxu0 0.0
  %779 = vmatprep.subr.mxu0 0.0
  %780 = vmatpush1.msra.mxu0 0.0
  %781 = vmatprep.mubr.f32.mxu0 0.0
  %782 = vmatmul.mubr.f32.gmra.mrb[0].mxu0 %v684
  %v783 = vpop.f32.mrb[0].mxu0
  %v784 = vadd.f32 0.0, %v783
  %v785 = vpop.f32.mrb[0].mxu0
  %786 = vmatprep.mubr.f32.mxu0 0.0
  %787 = vmatmul.mubr.f32.gmra.mrb[0].mxu0 %v685
  %v788 = vpop.f32.mrb[0].mxu0
  %v789 = vadd.f32 0.0, %v788
  %v790 = vpop.f32.mrb[0].mxu0
  %791 = vmatprep.mubr.f32.mxu0 0.0
  %792 = vmatmul.mubr.f32.gmra.mrb[0].mxu0 %v686
  %v793 = vpop.f32.mrb[0].mxu0
  %v794 = vadd.f32 0.0, %v793
  %v795 = vpop.f32.mrb[0].mxu0
  %796 = vmatprep.mubr.f32.mxu0 0.0
  %797 = vmatmul.mubr.f32.gmra.mrb[0].mxu0 %v687
  %v798 = vpop.f32.mrb[0].mxu0
  %v799 = vadd.f32 0.0, %v798
  %v800 = vpop.f32.mrb[0].mxu0
  %801 = vmatprep.mubr.f32.mxu0 0.0
  %802 = vmatmul.mubr.f32.gmra.mrb[0].mxu0 %v688
  %v803 = vpop.f32.mrb[0].mxu0
  %v804 = vadd.f32 0.0, %v803
  %v805 = vpop.f32.mrb[0].mxu0
  %806 = vmatprep.mubr.f32.mxu0 0.0
  %807 = vmatmul.mubr.f32.gmra.mrb[0].mxu0 %v689
  %v808 = vpop.f32.mrb[0].mxu0
  %v809 = vadd.f32 0.0, %v808
  %v810 = vpop.f32.mrb[0].mxu0
  %811 = vmatprep.mubr.f32.mxu0 0.0
  %812 = vmatmul.mubr.f32.gmra.mrb[0].mxu0 %v690
  %v813 = vpop.f32.mrb[0].mxu0
  %v814 = vadd.f32 0.0, %v813
  %v815 = vpop.f32.mrb[0].mxu0
  %816 = vmatprep.mubr.f32.mxu0 0.0
  %817 = vmatmul.mubr.f32.gmra.mrb[0].mxu0 %v691
  %v818 = vpop.f32.mrb[0].mxu0
  %v819 = vadd.f32 0.0, %v818
  %v820 = vpop.f32.mrb[0].mxu0
  %821 = vmatprep.mubr.f32.mxu0 0.0
  %822 = vmatmul.mubr.f32.gmra.mrb[0].mxu0 %v692
  %v823 = vpop.f32.mrb[0].mxu0
  %v824 = vadd.f32 0.0, %v823
  %v825 = vpop.f32.mrb[0].mxu0
  %826 = vmatprep.mubr.f32.mxu0 0.0
  %827 = vmatmul.mubr.f32.gmra.mrb[0].mxu0 %v693
  %v828 = vpop.f32.mrb[0].mxu0
  %v829 = vadd.f32 0.0, %v828
  %v830 = vpop.f32.mrb[0].mxu0
  %831 = vmatprep.mubr.f32.mxu0 0.0
  %832 = vmatmul.mubr.f32.gmra.mrb[0].mxu0 %v694
  %v833 = vpop.f32.mrb[0].mxu0
  %v834 = vadd.f32 0.0, %v833
  %v835 = vpop.f32.mrb[0].mxu0
  %836 = vmatprep.mubr.f32.mxu0 0.0
  %837 = vmatmul.mubr.f32.gmra.mrb[0].mxu0 %v695
  %v838 = vpop.f32.mrb[0].mxu0
  %v839 = vadd.f32 0.0, %v838
  %v840 = vpop.f32.mrb[0].mxu0
  %841 = vmatprep.mubr.f32.mxu0 0.0
  %842 = vmatmul.mubr.f32.gmra.mrb[0].mxu0 %v696
  %v843 = vpop.f32.mrb[0].mxu0
  %v844 = vadd.f32 0.0, %v843
  %v845 = vpop.f32.mrb[0].mxu0
  %846 = vmatprep.mubr.f32.mxu0 0.0
  %847 = vmatmul.mubr.f32.gmra.mrb[0].mxu0 %v697
  %v848 = vpop.f32.mrb[0].mxu0
  %v849 = vadd.f32 0.0, %v848
  %v850 = vpop.f32.mrb[0].mxu0
  %851 = vmatprep.mubr.f32.mxu0 0.0
  %852 = vmatmul.mubr.f32.gmra.mrb[0].mxu0 %v698
  %v853 = vpop.f32.mrb[0].mxu0
  %v854 = vadd.f32 0.0, %v853
  %v855 = vpop.f32.mrb[0].mxu0
  %856 = vmatprep.mubr.f32.mxu0 0.0
  %857 = vmatmul.mubr.f32.gmra.mrb[0].mxu0 %v699
  %v858 = vpop.f32.mrb[0].mxu0
  %v859 = vadd.f32 0.0, %v858
  %v860 = vpop.f32.mrb[0].mxu0
  %861 = vdwg.mxu0
  %v862 = vadd.f32 %v445, %v784
  %v863 = vadd.f32 %v450, %v789
  %v864 = vadd.f32 %v455, %v794
  %v865 = vadd.f32 %v460, %v799
  %v866 = vadd.f32 %v465, %v804
  %v867 = vadd.f32 %v470, %v809
  %v868 = vadd.f32 %v475, %v814
  %v869 = vadd.f32 %v480, %v819
  %v870 = vadd.f32 %v485, %v824
  %v871 = vadd.f32 %v490, %v829
  %v872 = vadd.f32 %v495, %v834
  %v873 = vadd.f32 %v500, %v839
  %v874 = vadd.f32 %v505, %v844
  %v875 = vadd.f32 %v510, %v849
  %v876 = vadd.f32 %v515, %v854
  %v877 = vadd.f32 %v520, %v859
  %v878 = vld [vmem:[%s3] sm:$0x1]
  %v880 = vlaneseq
  %v881 = vshrl.u32 %v880, 7
  %v882 = vsub.s32 0, %v881
  %v883 = vrot.slane %v878, %v882
  %v885 = vadd.f32 %v862, %v883
  %v886 = vadd.f32 %v863, %v883
  %v887 = vadd.f32 %v864, %v883
  %v888 = vadd.f32 %v865, %v883
  %v889 = vadd.f32 %v866, %v883
  %v890 = vadd.f32 %v867, %v883
  %v891 = vadd.f32 %v868, %v883
  %v892 = vadd.f32 %v869, %v883
  %v893 = vadd.f32 %v870, %v883
  %v894 = vadd.f32 %v871, %v883
  %v895 = vadd.f32 %v872, %v883
  %v896 = vadd.f32 %v873, %v883
  %v897 = vadd.f32 %v874, %v883
  %v898 = vadd.f32 %v875, %v883
  %v899 = vadd.f32 %v876, %v883
  %v900 = vadd.f32 %v877, %v883
  %v901 = vmax.f32 %v885, 0.0
  %v902 = vmax.f32 %v886, 0.0
  %v903 = vmax.f32 %v887, 0.0
  %v904 = vmax.f32 %v888, 0.0
  %v905 = vmax.f32 %v889, 0.0
  %v906 = vmax.f32 %v890, 0.0
  %v907 = vmax.f32 %v891, 0.0
  %v908 = vmax.f32 %v892, 0.0
  %v909 = vmax.f32 %v893, 0.0
  %v910 = vmax.f32 %v894, 0.0
  %v911 = vmax.f32 %v895, 0.0
  %v912 = vmax.f32 %v896, 0.0
  %v913 = vmax.f32 %v897, 0.0
  %v914 = vmax.f32 %v898, 0.0
  %v915 = vmax.f32 %v899, 0.0
  %v916 = vmax.f32 %v900, 0.0
  %v917 = vld [vmem:[%s4] sm:$0xff]
  %v918 = vld [vmem:[%s4 + $0x8] sm:$0xff]
  %v919 = vld [vmem:[%s4 + $0x10] sm:$0xff]
  %v920 = vld [vmem:[%s4 + $0x18] sm:$0xff]
  %v921 = vld [vmem:[%s4 + $0x20] sm:$0xff]
  %v922 = vld [vmem:[%s4 + $0x28] sm:$0xff]
  %v923 = vld [vmem:[%s4 + $0x30] sm:$0xff]
  %v924 = vld [vmem:[%s4 + $0x38] sm:$0xff]
  %v925 = vld [vmem:[%s4 + $0x40] sm:$0xff]
  %v926 = vld [vmem:[%s4 + $0x48] sm:$0xff]
  %v927 = vld [vmem:[%s4 + $0x50] sm:$0xff]
  %v928 = vld [vmem:[%s4 + $0x58] sm:$0xff]
  %v929 = vld [vmem:[%s4 + $0x60] sm:$0xff]
  %v930 = vld [vmem:[%s4 + $0x68] sm:$0xff]
  %v931 = vld [vmem:[%s4 + $0x70] sm:$0xff]
  %v932 = vld [vmem:[%s4 + $0x78] sm:$0xff]
  %933 = vmatprep.subr.mxu0 0.0
  %934 = vmatpush1.msra.mxu0 %v901
  %935 = vmatprep.subr.mxu0 0.0
  %936 = vmatpush1.msra.mxu0 %v902
  %937 = vmatprep.subr.mxu0 0.0
  %938 = vmatpush1.msra.mxu0 %v903
  %939 = vmatprep.subr.mxu0 0.0
  %940 = vmatpush1.msra.mxu0 %v904
  %941 = vmatprep.subr.mxu0 0.0
  %942 = vmatpush1.msra.mxu0 %v905
  %943 = vmatprep.subr.mxu0 0.0
  %944 = vmatpush1.msra.mxu0 %v906
  %945 = vmatprep.subr.mxu0 0.0
  %946 = vmatpush1.msra.mxu0 %v907
  %947 = vmatprep.subr.mxu0 0.0
  %948 = vmatpush1.msra.mxu0 %v908
  %949 = vmatprep.subr.mxu0 0.0
  %950 = vmatpush1.msra.mxu0 %v909
  %951 = vmatprep.subr.mxu0 0.0
  %952 = vmatpush1.msra.mxu0 %v910
  %953 = vmatprep.subr.mxu0 0.0
  %954 = vmatpush1.msra.mxu0 %v911
  %955 = vmatprep.subr.mxu0 0.0
  %956 = vmatpush1.msra.mxu0 %v912
  %957 = vmatprep.subr.mxu0 0.0
  %958 = vmatpush1.msra.mxu0 %v913
  %959 = vmatprep.subr.mxu0 0.0
  %960 = vmatpush1.msra.mxu0 %v914
  %961 = vmatprep.subr.mxu0 0.0
  %962 = vmatpush1.msra.mxu0 %v915
  %963 = vmatprep.subr.mxu0 0.0
  %964 = vmatpush1.msra.mxu0 %v916
  %965 = vmatprep.subr.mxu0 0.0
  %966 = vmatpush1.msra.mxu0 0.0
  %967 = vmatprep.subr.mxu0 0.0
  %968 = vmatpush1.msra.mxu0 0.0
  %969 = vmatprep.subr.mxu0 0.0
  %970 = vmatpush1.msra.mxu0 0.0
  %971 = vmatprep.subr.mxu0 0.0
  %972 = vmatpush1.msra.mxu0 0.0
  %973 = vmatprep.subr.mxu0 0.0
  %974 = vmatpush1.msra.mxu0 0.0
  %975 = vmatprep.subr.mxu0 0.0
  %976 = vmatpush1.msra.mxu0 0.0
  %977 = vmatprep.subr.mxu0 0.0
  %978 = vmatpush1.msra.mxu0 0.0
  %979 = vmatprep.subr.mxu0 0.0
  %980 = vmatpush1.msra.mxu0 0.0
  %981 = vmatprep.subr.mxu0 0.0
  %982 = vmatpush1.msra.mxu0 0.0
  %983 = vmatprep.subr.mxu0 0.0
  %984 = vmatpush1.msra.mxu0 0.0
  %985 = vmatprep.subr.mxu0 0.0
  %986 = vmatpush1.msra.mxu0 0.0
  %987 = vmatprep.subr.mxu0 0.0
  %988 = vmatpush1.msra.mxu0 0.0
  %989 = vmatprep.subr.mxu0 0.0
  %990 = vmatpush1.msra.mxu0 0.0
  %991 = vmatprep.subr.mxu0 0.0
  %992 = vmatpush1.msra.mxu0 0.0
  %993 = vmatprep.subr.mxu0 0.0
  %994 = vmatpush1.msra.mxu0 0.0
  %995 = vmatprep.subr.mxu0 0.0
  %996 = vmatpush1.msra.mxu0 0.0
  %997 = vmatprep.mubr.f32.mxu0 0.0
  %998 = vmatmul.mubr.f32.gmra.mrb[0].mxu0 %v23
  %v999 = vpop.f32.mrb[0].mxu0
  %v1000 = vadd.f32 0.0, %v999
  %v1001 = vpop.f32.mrb[0].mxu0
  %1002 = vmatprep.mubr.f32.mxu0 0.0
  %1003 = vmatmul.mubr.f32.gmra.mrb[0].mxu0 %v24
  %v1004 = vpop.f32.mrb[0].mxu0
  %v1005 = vadd.f32 0.0, %v1004
  %v1006 = vpop.f32.mrb[0].mxu0
  %1007 = vmatprep.mubr.f32.mxu0 0.0
  %1008 = vmatmul.mubr.f32.gmra.mrb[0].mxu0 %v25
  %v1009 = vpop.f32.mrb[0].mxu0
  %v1010 = vadd.f32 0.0, %v1009
  %v1011 = vpop.f32.mrb[0].mxu0
  %1012 = vmatprep.mubr.f32.mxu0 0.0
  %1013 = vmatmul.mubr.f32.gmra.mrb[0].mxu0 %v26
  %v1014 = vpop.f32.mrb[0].mxu0
  %v1015 = vadd.f32 0.0, %v1014
  %v1016 = vpop.f32.mrb[0].mxu0
  %1017 = vmatprep.mubr.f32.mxu0 0.0
  %1018 = vmatmul.mubr.f32.gmra.mrb[0].mxu0 %v27
  %v1019 = vpop.f32.mrb[0].mxu0
  %v1020 = vadd.f32 0.0, %v1019
  %v1021 = vpop.f32.mrb[0].mxu0
  %1022 = vmatprep.mubr.f32.mxu0 0.0
  %1023 = vmatmul.mubr.f32.gmra.mrb[0].mxu0 %v28
  %v1024 = vpop.f32.mrb[0].mxu0
  %v1025 = vadd.f32 0.0, %v1024
  %v1026 = vpop.f32.mrb[0].mxu0
  %1027 = vmatprep.mubr.f32.mxu0 0.0
  %1028 = vmatmul.mubr.f32.gmra.mrb[0].mxu0 %v29
  %v1029 = vpop.f32.mrb[0].mxu0
  %v1030 = vadd.f32 0.0, %v1029
  %v1031 = vpop.f32.mrb[0].mxu0
  %1032 = vmatprep.mubr.f32.mxu0 0.0
  %1033 = vmatmul.mubr.f32.gmra.mrb[0].mxu0 %v30
  %v1034 = vpop.f32.mrb[0].mxu0
  %v1035 = vadd.f32 0.0, %v1034
  %v1036 = vpop.f32.mrb[0].mxu0
  %1037 = vmatprep.mubr.f32.mxu0 0.0
  %1038 = vmatmul.mubr.f32.gmra.mrb[0].mxu0 %v31
  %v1039 = vpop.f32.mrb[0].mxu0
  %v1040 = vadd.f32 0.0, %v1039
  %v1041 = vpop.f32.mrb[0].mxu0
  %1042 = vmatprep.mubr.f32.mxu0 0.0
  %1043 = vmatmul.mubr.f32.gmra.mrb[0].mxu0 %v32
  %v1044 = vpop.f32.mrb[0].mxu0
  %v1045 = vadd.f32 0.0, %v1044
  %v1046 = vpop.f32.mrb[0].mxu0
  %1047 = vmatprep.mubr.f32.mxu0 0.0
  %1048 = vmatmul.mubr.f32.gmra.mrb[0].mxu0 %v33
  %v1049 = vpop.f32.mrb[0].mxu0
  %v1050 = vadd.f32 0.0, %v1049
  %v1051 = vpop.f32.mrb[0].mxu0
  %1052 = vmatprep.mubr.f32.mxu0 0.0
  %1053 = vmatmul.mubr.f32.gmra.mrb[0].mxu0 %v34
  %v1054 = vpop.f32.mrb[0].mxu0
  %v1055 = vadd.f32 0.0, %v1054
  %v1056 = vpop.f32.mrb[0].mxu0
  %1057 = vmatprep.mubr.f32.mxu0 0.0
  %1058 = vmatmul.mubr.f32.gmra.mrb[0].mxu0 %v35
  %v1059 = vpop.f32.mrb[0].mxu0
  %v1060 = vadd.f32 0.0, %v1059
  %v1061 = vpop.f32.mrb[0].mxu0
  %1062 = vmatprep.mubr.f32.mxu0 0.0
  %1063 = vmatmul.mubr.f32.gmra.mrb[0].mxu0 %v36
  %v1064 = vpop.f32.mrb[0].mxu0
  %v1065 = vadd.f32 0.0, %v1064
  %v1066 = vpop.f32.mrb[0].mxu0
  %1067 = vmatprep.mubr.f32.mxu0 0.0
  %1068 = vmatmul.mubr.f32.gmra.mrb[0].mxu0 %v37
  %v1069 = vpop.f32.mrb[0].mxu0
  %v1070 = vadd.f32 0.0, %v1069
  %v1071 = vpop.f32.mrb[0].mxu0
  %1072 = vmatprep.mubr.f32.mxu0 0.0
  %1073 = vmatmul.mubr.f32.gmra.mrb[0].mxu0 %v38
  %v1074 = vpop.f32.mrb[0].mxu0
  %v1075 = vadd.f32 0.0, %v1074
  %v1076 = vpop.f32.mrb[0].mxu0
  %1077 = vdwg.mxu0
  %s1078 = scalar_lea.vmem %s4, 128
  %v1079 = vld [vmem:[%s1078] sm:$0xff]
  %v1080 = vld [vmem:[%s1078 + $0x8] sm:$0xff]
  %v1081 = vld [vmem:[%s1078 + $0x10] sm:$0xff]
  %v1082 = vld [vmem:[%s1078 + $0x18] sm:$0xff]
  %v1083 = vld [vmem:[%s1078 + $0x20] sm:$0xff]
  %v1084 = vld [vmem:[%s1078 + $0x28] sm:$0xff]
  %v1085 = vld [vmem:[%s1078 + $0x30] sm:$0xff]
  %v1086 = vld [vmem:[%s1078 + $0x38] sm:$0xff]
  %v1087 = vld [vmem:[%s1078 + $0x40] sm:$0xff]
  %v1088 = vld [vmem:[%s1078 + $0x48] sm:$0xff]
  %v1089 = vld [vmem:[%s1078 + $0x50] sm:$0xff]
  %v1090 = vld [vmem:[%s1078 + $0x58] sm:$0xff]
  %v1091 = vld [vmem:[%s1078 + $0x60] sm:$0xff]
  %v1092 = vld [vmem:[%s1078 + $0x68] sm:$0xff]
  %v1093 = vld [vmem:[%s1078 + $0x70] sm:$0xff]
  %v1094 = vld [vmem:[%s1078 + $0x78] sm:$0xff]
  %1095 = vmatprep.subr.mxu0 0.0
  %1096 = vmatpush1.msra.mxu0 %v1079
  %1097 = vmatprep.subr.mxu0 0.0
  %1098 = vmatpush1.msra.mxu0 %v1080
  %1099 = vmatprep.subr.mxu0 0.0
  %1100 = vmatpush1.msra.mxu0 %v1081
  %1101 = vmatprep.subr.mxu0 0.0
  %1102 = vmatpush1.msra.mxu0 %v1082
  %1103 = vmatprep.subr.mxu0 0.0
  %1104 = vmatpush1.msra.mxu0 %v1083
  %1105 = vmatprep.subr.mxu0 0.0
  %1106 = vmatpush1.msra.mxu0 %v1084
  %1107 = vmatprep.subr.mxu0 0.0
  %1108 = vmatpush1.msra.mxu0 %v1085
  %1109 = vmatprep.subr.mxu0 0.0
  %1110 = vmatpush1.msra.mxu0 %v1086
  %1111 = vmatprep.subr.mxu0 0.0
  %1112 = vmatpush1.msra.mxu0 %v1087
  %1113 = vmatprep.subr.mxu0 0.0
  %1114 = vmatpush1.msra.mxu0 %v1088
  %1115 = vmatprep.subr.mxu0 0.0
  %1116 = vmatpush1.msra.mxu0 %v1089
  %1117 = vmatprep.subr.mxu0 0.0
  %1118 = vmatpush1.msra.mxu0 %v1090
  %1119 = vmatprep.subr.mxu0 0.0
  %1120 = vmatpush1.msra.mxu0 %v1091
  %1121 = vmatprep.subr.mxu0 0.0
  %1122 = vmatpush1.msra.mxu0 %v1092
  %1123 = vmatprep.subr.mxu0 0.0
  %1124 = vmatpush1.msra.mxu0 %v1093
  %1125 = vmatprep.subr.mxu0 0.0
  %1126 = vmatpush1.msra.mxu0 %v1094
  %1127 = vmatprep.subr.mxu0 0.0
  %1128 = vmatpush1.msra.mxu0 0.0
  %1129 = vmatprep.subr.mxu0 0.0
  %1130 = vmatpush1.msra.mxu0 0.0
  %1131 = vmatprep.subr.mxu0 0.0
  %1132 = vmatpush1.msra.mxu0 0.0
  %1133 = vmatprep.subr.mxu0 0.0
  %1134 = vmatpush1.msra.mxu0 0.0
  %1135 = vmatprep.subr.mxu0 0.0
  %1136 = vmatpush1.msra.mxu0 0.0
  %1137 = vmatprep.subr.mxu0 0.0
  %1138 = vmatpush1.msra.mxu0 0.0
  %1139 = vmatprep.subr.mxu0 0.0
  %1140 = vmatpush1.msra.mxu0 0.0
  %1141 = vmatprep.subr.mxu0 0.0
  %1142 = vmatpush1.msra.mxu0 0.0
  %1143 = vmatprep.subr.mxu0 0.0
  %1144 = vmatpush1.msra.mxu0 0.0
  %1145 = vmatprep.subr.mxu0 0.0
  %1146 = vmatpush1.msra.mxu0 0.0
  %1147 = vmatprep.subr.mxu0 0.0
  %1148 = vmatpush1.msra.mxu0 0.0
  %1149 = vmatprep.subr.mxu0 0.0
  %1150 = vmatpush1.msra.mxu0 0.0
  %1151 = vmatprep.subr.mxu0 0.0
  %1152 = vmatpush1.msra.mxu0 0.0
  %1153 = vmatprep.subr.mxu0 0.0
  %1154 = vmatpush1.msra.mxu0 0.0
  %1155 = vmatprep.subr.mxu0 0.0
  %1156 = vmatpush1.msra.mxu0 0.0
  %1157 = vmatprep.subr.mxu0 0.0
  %1158 = vmatpush1.msra.mxu0 0.0
  %1159 = vmatprep.mubr.f32.mxu0 0.0
  %1160 = vmatmul.mubr.f32.gmra.mrb[0].mxu0 %v1000
  %v1161 = vpop.f32.mrb[0].mxu0
  %v1162 = vadd.f32 0.0, %v1161
  %v1163 = vpop.f32.mrb[0].mxu0
  %1164 = vmatprep.mubr.f32.mxu0 0.0
  %1165 = vmatmul.mubr.f32.gmra.mrb[0].mxu0 %v1005
  %v1166 = vpop.f32.mrb[0].mxu0
  %v1167 = vadd.f32 0.0, %v1166
  %v1168 = vpop.f32.mrb[0].mxu0
  %1169 = vmatprep.mubr.f32.mxu0 0.0
  %1170 = vmatmul.mubr.f32.gmra.mrb[0].mxu0 %v1010
  %v1171 = vpop.f32.mrb[0].mxu0
  %v1172 = vadd.f32 0.0, %v1171
  %v1173 = vpop.f32.mrb[0].mxu0
  %1174 = vmatprep.mubr.f32.mxu0 0.0
  %1175 = vmatmul.mubr.f32.gmra.mrb[0].mxu0 %v1015
  %v1176 = vpop.f32.mrb[0].mxu0
  %v1177 = vadd.f32 0.0, %v1176
  %v1178 = vpop.f32.mrb[0].mxu0
  %1179 = vmatprep.mubr.f32.mxu0 0.0
  %1180 = vmatmul.mubr.f32.gmra.mrb[0].mxu0 %v1020
  %v1181 = vpop.f32.mrb[0].mxu0
  %v1182 = vadd.f32 0.0, %v1181
  %v1183 = vpop.f32.mrb[0].mxu0
  %1184 = vmatprep.mubr.f32.mxu0 0.0
  %1185 = vmatmul.mubr.f32.gmra.mrb[0].mxu0 %v1025
  %v1186 = vpop.f32.mrb[0].mxu0
  %v1187 = vadd.f32 0.0, %v1186
  %v1188 = vpop.f32.mrb[0].mxu0
  %1189 = vmatprep.mubr.f32.mxu0 0.0
  %1190 = vmatmul.mubr.f32.gmra.mrb[0].mxu0 %v1030
  %v1191 = vpop.f32.mrb[0].mxu0
  %v1192 = vadd.f32 0.0, %v1191
  %v1193 = vpop.f32.mrb[0].mxu0
  %1194 = vmatprep.mubr.f32.mxu0 0.0
  %1195 = vmatmul.mubr.f32.gmra.mrb[0].mxu0 %v1035
  %v1196 = vpop.f32.mrb[0].mxu0
  %v1197 = vadd.f32 0.0, %v1196
  %v1198 = vpop.f32.mrb[0].mxu0
  %1199 = vmatprep.mubr.f32.mxu0 0.0
  %1200 = vmatmul.mubr.f32.gmra.mrb[0].mxu0 %v1040
  %v1201 = vpop.f32.mrb[0].mxu0
  %v1202 = vadd.f32 0.0, %v1201
  %v1203 = vpop.f32.mrb[0].mxu0
  %1204 = vmatprep.mubr.f32.mxu0 0.0
  %1205 = vmatmul.mubr.f32.gmra.mrb[0].mxu0 %v1045
  %v1206 = vpop.f32.mrb[0].mxu0
  %v1207 = vadd.f32 0.0, %v1206
  %v1208 = vpop.f32.mrb[0].mxu0
  %1209 = vmatprep.mubr.f32.mxu0 0.0
  %1210 = vmatmul.mubr.f32.gmra.mrb[0].mxu0 %v1050
  %v1211 = vpop.f32.mrb[0].mxu0
  %v1212 = vadd.f32 0.0, %v1211
  %v1213 = vpop.f32.mrb[0].mxu0
  %1214 = vmatprep.mubr.f32.mxu0 0.0
  %1215 = vmatmul.mubr.f32.gmra.mrb[0].mxu0 %v1055
  %v1216 = vpop.f32.mrb[0].mxu0
  %v1217 = vadd.f32 0.0, %v1216
  %v1218 = vpop.f32.mrb[0].mxu0
  %1219 = vmatprep.mubr.f32.mxu0 0.0
  %1220 = vmatmul.mubr.f32.gmra.mrb[0].mxu0 %v1060
  %v1221 = vpop.f32.mrb[0].mxu0
  %v1222 = vadd.f32 0.0, %v1221
  %v1223 = vpop.f32.mrb[0].mxu0
  %1224 = vmatprep.mubr.f32.mxu0 0.0
  %1225 = vmatmul.mubr.f32.gmra.mrb[0].mxu0 %v1065
  %v1226 = vpop.f32.mrb[0].mxu0
  %v1227 = vadd.f32 0.0, %v1226
  %v1228 = vpop.f32.mrb[0].mxu0
  %1229 = vmatprep.mubr.f32.mxu0 0.0
  %1230 = vmatmul.mubr.f32.gmra.mrb[0].mxu0 %v1070
  %v1231 = vpop.f32.mrb[0].mxu0
  %v1232 = vadd.f32 0.0, %v1231
  %v1233 = vpop.f32.mrb[0].mxu0
  %1234 = vmatprep.mubr.f32.mxu0 0.0
  %1235 = vmatmul.mubr.f32.gmra.mrb[0].mxu0 %v1075
  %v1236 = vpop.f32.mrb[0].mxu0
  %v1237 = vadd.f32 0.0, %v1236
  %v1238 = vpop.f32.mrb[0].mxu0
  %1239 = vdwg.mxu0
  %1240 = vmatprep.subr.mxu0 0.0
  %1241 = vmatpush1.msra.mxu0 %v917
  %1242 = vmatprep.subr.mxu0 0.0
  %1243 = vmatpush1.msra.mxu0 %v918
  %1244 = vmatprep.subr.mxu0 0.0
  %1245 = vmatpush1.msra.mxu0 %v919
  %1246 = vmatprep.subr.mxu0 0.0
  %1247 = vmatpush1.msra.mxu0 %v920
  %1248 = vmatprep.subr.mxu0 0.0
  %1249 = vmatpush1.msra.mxu0 %v921
  %1250 = vmatprep.subr.mxu0 0.0
  %1251 = vmatpush1.msra.mxu0 %v922
  %1252 = vmatprep.subr.mxu0 0.0
  %1253 = vmatpush1.msra.mxu0 %v923
  %1254 = vmatprep.subr.mxu0 0.0
  %1255 = vmatpush1.msra.mxu0 %v924
  %1256 = vmatprep.subr.mxu0 0.0
  %1257 = vmatpush1.msra.mxu0 %v925
  %1258 = vmatprep.subr.mxu0 0.0
  %1259 = vmatpush1.msra.mxu0 %v926
  %1260 = vmatprep.subr.mxu0 0.0
  %1261 = vmatpush1.msra.mxu0 %v927
  %1262 = vmatprep.subr.mxu0 0.0
  %1263 = vmatpush1.msra.mxu0 %v928
  %1264 = vmatprep.subr.mxu0 0.0
  %1265 = vmatpush1.msra.mxu0 %v929
  %1266 = vmatprep.subr.mxu0 0.0
  %1267 = vmatpush1.msra.mxu0 %v930
  %1268 = vmatprep.subr.mxu0 0.0
  %1269 = vmatpush1.msra.mxu0 %v931
  %1270 = vmatprep.subr.mxu0 0.0
  %1271 = vmatpush1.msra.mxu0 %v932
  %1272 = vmatprep.subr.mxu0 0.0
  %1273 = vmatpush1.msra.mxu0 0.0
  %1274 = vmatprep.subr.mxu0 0.0
  %1275 = vmatpush1.msra.mxu0 0.0
  %1276 = vmatprep.subr.mxu0 0.0
  %1277 = vmatpush1.msra.mxu0 0.0
  %1278 = vmatprep.subr.mxu0 0.0
  %1279 = vmatpush1.msra.mxu0 0.0
  %1280 = vmatprep.subr.mxu0 0.0
  %1281 = vmatpush1.msra.mxu0 0.0
  %1282 = vmatprep.subr.mxu0 0.0
  %1283 = vmatpush1.msra.mxu0 0.0
  %1284 = vmatprep.subr.mxu0 0.0
  %1285 = vmatpush1.msra.mxu0 0.0
  %1286 = vmatprep.subr.mxu0 0.0
  %1287 = vmatpush1.msra.mxu0 0.0
  %1288 = vmatprep.subr.mxu0 0.0
  %1289 = vmatpush1.msra.mxu0 0.0
  %1290 = vmatprep.subr.mxu0 0.0
  %1291 = vmatpush1.msra.mxu0 0.0
  %1292 = vmatprep.subr.mxu0 0.0
  %1293 = vmatpush1.msra.mxu0 0.0
  %1294 = vmatprep.subr.mxu0 0.0
  %1295 = vmatpush1.msra.mxu0 0.0
  %1296 = vmatprep.subr.mxu0 0.0
  %1297 = vmatpush1.msra.mxu0 0.0
  %1298 = vmatprep.subr.mxu0 0.0
  %1299 = vmatpush1.msra.mxu0 0.0
  %1300 = vmatprep.subr.mxu0 0.0
  %1301 = vmatpush1.msra.mxu0 0.0
  %1302 = vmatprep.subr.mxu0 0.0
  %1303 = vmatpush1.msra.mxu0 0.0
  %1304 = vmatprep.mubr.f32.mxu0 0.0
  %1305 = vmatmul.mubr.f32.gmra.mrb[0].mxu0 %v901
  %v1306 = vpop.f32.mrb[0].mxu0
  %v1307 = vadd.f32 %v1162, %v1306
  %v1308 = vpop.f32.mrb[0].mxu0
  %1309 = vmatprep.mubr.f32.mxu0 0.0
  %1310 = vmatmul.mubr.f32.gmra.mrb[0].mxu0 %v902
  %v1311 = vpop.f32.mrb[0].mxu0
  %v1312 = vadd.f32 %v1167, %v1311
  %v1313 = vpop.f32.mrb[0].mxu0
  %1314 = vmatprep.mubr.f32.mxu0 0.0
  %1315 = vmatmul.mubr.f32.gmra.mrb[0].mxu0 %v903
  %v1316 = vpop.f32.mrb[0].mxu0
  %v1317 = vadd.f32 %v1172, %v1316
  %v1318 = vpop.f32.mrb[0].mxu0
  %1319 = vmatprep.mubr.f32.mxu0 0.0
  %1320 = vmatmul.mubr.f32.gmra.mrb[0].mxu0 %v904
  %v1321 = vpop.f32.mrb[0].mxu0
  %v1322 = vadd.f32 %v1177, %v1321
  %v1323 = vpop.f32.mrb[0].mxu0
  %1324 = vmatprep.mubr.f32.mxu0 0.0
  %1325 = vmatmul.mubr.f32.gmra.mrb[0].mxu0 %v905
  %v1326 = vpop.f32.mrb[0].mxu0
  %v1327 = vadd.f32 %v1182, %v1326
  %v1328 = vpop.f32.mrb[0].mxu0
  %1329 = vmatprep.mubr.f32.mxu0 0.0
  %1330 = vmatmul.mubr.f32.gmra.mrb[0].mxu0 %v906
  %v1331 = vpop.f32.mrb[0].mxu0
  %v1332 = vadd.f32 %v1187, %v1331
  %v1333 = vpop.f32.mrb[0].mxu0
  %1334 = vmatprep.mubr.f32.mxu0 0.0
  %1335 = vmatmul.mubr.f32.gmra.mrb[0].mxu0 %v907
  %v1336 = vpop.f32.mrb[0].mxu0
  %v1337 = vadd.f32 %v1192, %v1336
  %v1338 = vpop.f32.mrb[0].mxu0
  %1339 = vmatprep.mubr.f32.mxu0 0.0
  %1340 = vmatmul.mubr.f32.gmra.mrb[0].mxu0 %v908
  %v1341 = vpop.f32.mrb[0].mxu0
  %v1342 = vadd.f32 %v1197, %v1341
  %v1343 = vpop.f32.mrb[0].mxu0
  %1344 = vmatprep.mubr.f32.mxu0 0.0
  %1345 = vmatmul.mubr.f32.gmra.mrb[0].mxu0 %v909
  %v1346 = vpop.f32.mrb[0].mxu0
  %v1347 = vadd.f32 %v1202, %v1346
  %v1348 = vpop.f32.mrb[0].mxu0
  %1349 = vmatprep.mubr.f32.mxu0 0.0
  %1350 = vmatmul.mubr.f32.gmra.mrb[0].mxu0 %v910
  %v1351 = vpop.f32.mrb[0].mxu0
  %v1352 = vadd.f32 %v1207, %v1351
  %v1353 = vpop.f32.mrb[0].mxu0
  %1354 = vmatprep.mubr.f32.mxu0 0.0
  %1355 = vmatmul.mubr.f32.gmra.mrb[0].mxu0 %v911
  %v1356 = vpop.f32.mrb[0].mxu0
  %v1357 = vadd.f32 %v1212, %v1356
  %v1358 = vpop.f32.mrb[0].mxu0
  %1359 = vmatprep.mubr.f32.mxu0 0.0
  %1360 = vmatmul.mubr.f32.gmra.mrb[0].mxu0 %v912
  %v1361 = vpop.f32.mrb[0].mxu0
  %v1362 = vadd.f32 %v1217, %v1361
  %v1363 = vpop.f32.mrb[0].mxu0
  %1364 = vmatprep.mubr.f32.mxu0 0.0
  %1365 = vmatmul.mubr.f32.gmra.mrb[0].mxu0 %v913
  %v1366 = vpop.f32.mrb[0].mxu0
  %v1367 = vadd.f32 %v1222, %v1366
  %v1368 = vpop.f32.mrb[0].mxu0
  %1369 = vmatprep.mubr.f32.mxu0 0.0
  %1370 = vmatmul.mubr.f32.gmra.mrb[0].mxu0 %v914
  %v1371 = vpop.f32.mrb[0].mxu0
  %v1372 = vadd.f32 %v1227, %v1371
  %v1373 = vpop.f32.mrb[0].mxu0
  %1374 = vmatprep.mubr.f32.mxu0 0.0
  %1375 = vmatmul.mubr.f32.gmra.mrb[0].mxu0 %v915
  %v1376 = vpop.f32.mrb[0].mxu0
  %v1377 = vadd.f32 %v1232, %v1376
  %v1378 = vpop.f32.mrb[0].mxu0
  %1379 = vmatprep.mubr.f32.mxu0 0.0
  %1380 = vmatmul.mubr.f32.gmra.mrb[0].mxu0 %v916
  %v1381 = vpop.f32.mrb[0].mxu0
  %v1382 = vadd.f32 %v1237, %v1381
  %v1383 = vpop.f32.mrb[0].mxu0
  %1384 = vdwg.mxu0
  %1385 = vmatprep.subr.mxu0 0.0
  %1386 = vmatpush1.msra.mxu0 %v1000
  %1387 = vmatprep.subr.mxu0 0.0
  %1388 = vmatpush1.msra.mxu0 %v1005
  %1389 = vmatprep.subr.mxu0 0.0
  %1390 = vmatpush1.msra.mxu0 %v1010
  %1391 = vmatprep.subr.mxu0 0.0
  %1392 = vmatpush1.msra.mxu0 %v1015
  %1393 = vmatprep.subr.mxu0 0.0
  %1394 = vmatpush1.msra.mxu0 %v1020
  %1395 = vmatprep.subr.mxu0 0.0
  %1396 = vmatpush1.msra.mxu0 %v1025
  %1397 = vmatprep.subr.mxu0 0.0
  %1398 = vmatpush1.msra.mxu0 %v1030
  %1399 = vmatprep.subr.mxu0 0.0
  %1400 = vmatpush1.msra.mxu0 %v1035
  %1401 = vmatprep.subr.mxu0 0.0
  %1402 = vmatpush1.msra.mxu0 %v1040
  %1403 = vmatprep.subr.mxu0 0.0
  %1404 = vmatpush1.msra.mxu0 %v1045
  %1405 = vmatprep.subr.mxu0 0.0
  %1406 = vmatpush1.msra.mxu0 %v1050
  %1407 = vmatprep.subr.mxu0 0.0
  %1408 = vmatpush1.msra.mxu0 %v1055
  %1409 = vmatprep.subr.mxu0 0.0
  %1410 = vmatpush1.msra.mxu0 %v1060
  %1411 = vmatprep.subr.mxu0 0.0
  %1412 = vmatpush1.msra.mxu0 %v1065
  %1413 = vmatprep.subr.mxu0 0.0
  %1414 = vmatpush1.msra.mxu0 %v1070
  %1415 = vmatprep.subr.mxu0 0.0
  %1416 = vmatpush1.msra.mxu0 %v1075
  %1417 = vmatprep.subr.mxu0 0.0
  %1418 = vmatpush1.msra.mxu0 0.0
  %1419 = vmatprep.subr.mxu0 0.0
  %1420 = vmatpush1.msra.mxu0 0.0
  %1421 = vmatprep.subr.mxu0 0.0
  %1422 = vmatpush1.msra.mxu0 0.0
  %1423 = vmatprep.subr.mxu0 0.0
  %1424 = vmatpush1.msra.mxu0 0.0
  %1425 = vmatprep.subr.mxu0 0.0
  %1426 = vmatpush1.msra.mxu0 0.0
  %1427 = vmatprep.subr.mxu0 0.0
  %1428 = vmatpush1.msra.mxu0 0.0
  %1429 = vmatprep.subr.mxu0 0.0
  %1430 = vmatpush1.msra.mxu0 0.0
  %1431 = vmatprep.subr.mxu0 0.0
  %1432 = vmatpush1.msra.mxu0 0.0
  %1433 = vmatprep.subr.mxu0 0.0
  %1434 = vmatpush1.msra.mxu0 0.0
  %1435 = vmatprep.subr.mxu0 0.0
  %1436 = vmatpush1.msra.mxu0 0.0
  %1437 = vmatprep.subr.mxu0 0.0
  %1438 = vmatpush1.msra.mxu0 0.0
  %1439 = vmatprep.subr.mxu0 0.0
  %1440 = vmatpush1.msra.mxu0 0.0
  %1441 = vmatprep.subr.mxu0 0.0
  %1442 = vmatpush1.msra.mxu0 0.0
  %1443 = vmatprep.subr.mxu0 0.0
  %1444 = vmatpush1.msra.mxu0 0.0
  %1445 = vmatprep.subr.mxu0 0.0
  %1446 = vmatpush1.msra.mxu0 0.0
  %1447 = vmatprep.subr.mxu0 0.0
  %1448 = vmatpush1.msra.mxu0 0.0
  %1449 = vmatprep.mubr.f32.mxu0 0.0
  %1450 = vmatmul.mubr.f32.gmra.mrb[0].mxu0 %v23
  %v1451 = vpop.f32.mrb[0].mxu0
  %v1452 = vadd.f32 0.0, %v1451
  %v1453 = vpop.f32.mrb[0].mxu0
  %1454 = vmatprep.mubr.f32.mxu0 0.0
  %1455 = vmatmul.mubr.f32.gmra.mrb[0].mxu0 %v24
  %v1456 = vpop.f32.mrb[0].mxu0
  %v1457 = vadd.f32 0.0, %v1456
  %v1458 = vpop.f32.mrb[0].mxu0
  %1459 = vmatprep.mubr.f32.mxu0 0.0
  %1460 = vmatmul.mubr.f32.gmra.mrb[0].mxu0 %v25
  %v1461 = vpop.f32.mrb[0].mxu0
  %v1462 = vadd.f32 0.0, %v1461
  %v1463 = vpop.f32.mrb[0].mxu0
  %1464 = vmatprep.mubr.f32.mxu0 0.0
  %1465 = vmatmul.mubr.f32.gmra.mrb[0].mxu0 %v26
  %v1466 = vpop.f32.mrb[0].mxu0
  %v1467 = vadd.f32 0.0, %v1466
  %v1468 = vpop.f32.mrb[0].mxu0
  %1469 = vmatprep.mubr.f32.mxu0 0.0
  %1470 = vmatmul.mubr.f32.gmra.mrb[0].mxu0 %v27
  %v1471 = vpop.f32.mrb[0].mxu0
  %v1472 = vadd.f32 0.0, %v1471
  %v1473 = vpop.f32.mrb[0].mxu0
  %1474 = vmatprep.mubr.f32.mxu0 0.0
  %1475 = vmatmul.mubr.f32.gmra.mrb[0].mxu0 %v28
  %v1476 = vpop.f32.mrb[0].mxu0
  %v1477 = vadd.f32 0.0, %v1476
  %v1478 = vpop.f32.mrb[0].mxu0
  %1479 = vmatprep.mubr.f32.mxu0 0.0
  %1480 = vmatmul.mubr.f32.gmra.mrb[0].mxu0 %v29
  %v1481 = vpop.f32.mrb[0].mxu0
  %v1482 = vadd.f32 0.0, %v1481
  %v1483 = vpop.f32.mrb[0].mxu0
  %1484 = vmatprep.mubr.f32.mxu0 0.0
  %1485 = vmatmul.mubr.f32.gmra.mrb[0].mxu0 %v30
  %v1486 = vpop.f32.mrb[0].mxu0
  %v1487 = vadd.f32 0.0, %v1486
  %v1488 = vpop.f32.mrb[0].mxu0
  %1489 = vmatprep.mubr.f32.mxu0 0.0
  %1490 = vmatmul.mubr.f32.gmra.mrb[0].mxu0 %v31
  %v1491 = vpop.f32.mrb[0].mxu0
  %v1492 = vadd.f32 0.0, %v1491
  %v1493 = vpop.f32.mrb[0].mxu0
  %1494 = vmatprep.mubr.f32.mxu0 0.0
  %1495 = vmatmul.mubr.f32.gmra.mrb[0].mxu0 %v32
  %v1496 = vpop.f32.mrb[0].mxu0
  %v1497 = vadd.f32 0.0, %v1496
  %v1498 = vpop.f32.mrb[0].mxu0
  %1499 = vmatprep.mubr.f32.mxu0 0.0
  %1500 = vmatmul.mubr.f32.gmra.mrb[0].mxu0 %v33
  %v1501 = vpop.f32.mrb[0].mxu0
  %v1502 = vadd.f32 0.0, %v1501
  %v1503 = vpop.f32.mrb[0].mxu0
  %1504 = vmatprep.mubr.f32.mxu0 0.0
  %1505 = vmatmul.mubr.f32.gmra.mrb[0].mxu0 %v34
  %v1506 = vpop.f32.mrb[0].mxu0
  %v1507 = vadd.f32 0.0, %v1506
  %v1508 = vpop.f32.mrb[0].mxu0
  %1509 = vmatprep.mubr.f32.mxu0 0.0
  %1510 = vmatmul.mubr.f32.gmra.mrb[0].mxu0 %v35
  %v1511 = vpop.f32.mrb[0].mxu0
  %v1512 = vadd.f32 0.0, %v1511
  %v1513 = vpop.f32.mrb[0].mxu0
  %1514 = vmatprep.mubr.f32.mxu0 0.0
  %1515 = vmatmul.mubr.f32.gmra.mrb[0].mxu0 %v36
  %v1516 = vpop.f32.mrb[0].mxu0
  %v1517 = vadd.f32 0.0, %v1516
  %v1518 = vpop.f32.mrb[0].mxu0
  %1519 = vmatprep.mubr.f32.mxu0 0.0
  %1520 = vmatmul.mubr.f32.gmra.mrb[0].mxu0 %v37
  %v1521 = vpop.f32.mrb[0].mxu0
  %v1522 = vadd.f32 0.0, %v1521
  %v1523 = vpop.f32.mrb[0].mxu0
  %1524 = vmatprep.mubr.f32.mxu0 0.0
  %1525 = vmatmul.mubr.f32.gmra.mrb[0].mxu0 %v38
  %v1526 = vpop.f32.mrb[0].mxu0
  %v1527 = vadd.f32 0.0, %v1526
  %v1528 = vpop.f32.mrb[0].mxu0
  %1529 = vdwg.mxu0
  %v1530 = vmul.f32 %v1452, 2.0
  %v1531 = vmul.f32 %v1457, 2.0
  %v1532 = vmul.f32 %v1462, 2.0
  %v1533 = vmul.f32 %v1467, 2.0
  %v1534 = vmul.f32 %v1472, 2.0
  %v1535 = vmul.f32 %v1477, 2.0
  %v1536 = vmul.f32 %v1482, 2.0
  %v1537 = vmul.f32 %v1487, 2.0
  %v1538 = vmul.f32 %v1492, 2.0
  %v1539 = vmul.f32 %v1497, 2.0
  %v1540 = vmul.f32 %v1502, 2.0
  %v1541 = vmul.f32 %v1507, 2.0
  %v1542 = vmul.f32 %v1512, 2.0
  %v1543 = vmul.f32 %v1517, 2.0
  %v1544 = vmul.f32 %v1522, 2.0
  %v1545 = vmul.f32 %v1527, 2.0
  %v1546 = vsub.f32 %v1530, %v901
  %v1547 = vsub.f32 %v1531, %v902
  %v1548 = vsub.f32 %v1532, %v903
  %v1549 = vsub.f32 %v1533, %v904
  %v1550 = vsub.f32 %v1534, %v905
  %v1551 = vsub.f32 %v1535, %v906
  %v1552 = vsub.f32 %v1536, %v907
  %v1553 = vsub.f32 %v1537, %v908
  %v1554 = vsub.f32 %v1538, %v909
  %v1555 = vsub.f32 %v1539, %v910
  %v1556 = vsub.f32 %v1540, %v911
  %v1557 = vsub.f32 %v1541, %v912
  %v1558 = vsub.f32 %v1542, %v913
  %v1559 = vsub.f32 %v1543, %v914
  %v1560 = vsub.f32 %v1544, %v915
  %v1561 = vsub.f32 %v1545, %v916
  %s1562 = scalar_lea.vmem %s4, 256
  %v1563 = vld [vmem:[%s1562] sm:$0xff]
  %v1564 = vld [vmem:[%s1562 + $0x8] sm:$0xff]
  %v1565 = vld [vmem:[%s1562 + $0x10] sm:$0xff]
  %v1566 = vld [vmem:[%s1562 + $0x18] sm:$0xff]
  %v1567 = vld [vmem:[%s1562 + $0x20] sm:$0xff]
  %v1568 = vld [vmem:[%s1562 + $0x28] sm:$0xff]
  %v1569 = vld [vmem:[%s1562 + $0x30] sm:$0xff]
  %v1570 = vld [vmem:[%s1562 + $0x38] sm:$0xff]
  %v1571 = vld [vmem:[%s1562 + $0x40] sm:$0xff]
  %v1572 = vld [vmem:[%s1562 + $0x48] sm:$0xff]
  %v1573 = vld [vmem:[%s1562 + $0x50] sm:$0xff]
  %v1574 = vld [vmem:[%s1562 + $0x58] sm:$0xff]
  %v1575 = vld [vmem:[%s1562 + $0x60] sm:$0xff]
  %v1576 = vld [vmem:[%s1562 + $0x68] sm:$0xff]
  %v1577 = vld [vmem:[%s1562 + $0x70] sm:$0xff]
  %v1578 = vld [vmem:[%s1562 + $0x78] sm:$0xff]
  %1579 = vmatprep.subr.mxu0 0.0
  %1580 = vmatpush1.msra.mxu0 %v1563
  %1581 = vmatprep.subr.mxu0 0.0
  %1582 = vmatpush1.msra.mxu0 %v1564
  %1583 = vmatprep.subr.mxu0 0.0
  %1584 = vmatpush1.msra.mxu0 %v1565
  %1585 = vmatprep.subr.mxu0 0.0
  %1586 = vmatpush1.msra.mxu0 %v1566
  %1587 = vmatprep.subr.mxu0 0.0
  %1588 = vmatpush1.msra.mxu0 %v1567
  %1589 = vmatprep.subr.mxu0 0.0
  %1590 = vmatpush1.msra.mxu0 %v1568
  %1591 = vmatprep.subr.mxu0 0.0
  %1592 = vmatpush1.msra.mxu0 %v1569
  %1593 = vmatprep.subr.mxu0 0.0
  %1594 = vmatpush1.msra.mxu0 %v1570
  %1595 = vmatprep.subr.mxu0 0.0
  %1596 = vmatpush1.msra.mxu0 %v1571
  %1597 = vmatprep.subr.mxu0 0.0
  %1598 = vmatpush1.msra.mxu0 %v1572
  %1599 = vmatprep.subr.mxu0 0.0
  %1600 = vmatpush1.msra.mxu0 %v1573
  %1601 = vmatprep.subr.mxu0 0.0
  %1602 = vmatpush1.msra.mxu0 %v1574
  %1603 = vmatprep.subr.mxu0 0.0
  %1604 = vmatpush1.msra.mxu0 %v1575
  %1605 = vmatprep.subr.mxu0 0.0
  %1606 = vmatpush1.msra.mxu0 %v1576
  %1607 = vmatprep.subr.mxu0 0.0
  %1608 = vmatpush1.msra.mxu0 %v1577
  %1609 = vmatprep.subr.mxu0 0.0
  %1610 = vmatpush1.msra.mxu0 %v1578
  %1611 = vmatprep.subr.mxu0 0.0
  %1612 = vmatpush1.msra.mxu0 0.0
  %1613 = vmatprep.subr.mxu0 0.0
  %1614 = vmatpush1.msra.mxu0 0.0
  %1615 = vmatprep.subr.mxu0 0.0
  %1616 = vmatpush1.msra.mxu0 0.0
  %1617 = vmatprep.subr.mxu0 0.0
  %1618 = vmatpush1.msra.mxu0 0.0
  %1619 = vmatprep.subr.mxu0 0.0
  %1620 = vmatpush1.msra.mxu0 0.0
  %1621 = vmatprep.subr.mxu0 0.0
  %1622 = vmatpush1.msra.mxu0 0.0
  %1623 = vmatprep.subr.mxu0 0.0
  %1624 = vmatpush1.msra.mxu0 0.0
  %1625 = vmatprep.subr.mxu0 0.0
  %1626 = vmatpush1.msra.mxu0 0.0
  %1627 = vmatprep.subr.mxu0 0.0
  %1628 = vmatpush1.msra.mxu0 0.0
  %1629 = vmatprep.subr.mxu0 0.0
  %1630 = vmatpush1.msra.mxu0 0.0
  %1631 = vmatprep.subr.mxu0 0.0
  %1632 = vmatpush1.msra.mxu0 0.0
  %1633 = vmatprep.subr.mxu0 0.0
  %1634 = vmatpush1.msra.mxu0 0.0
  %1635 = vmatprep.subr.mxu0 0.0
  %1636 = vmatpush1.msra.mxu0 0.0
  %1637 = vmatprep.subr.mxu0 0.0
  %1638 = vmatpush1.msra.mxu0 0.0
  %1639 = vmatprep.subr.mxu0 0.0
  %1640 = vmatpush1.msra.mxu0 0.0
  %1641 = vmatprep.subr.mxu0 0.0
  %1642 = vmatpush1.msra.mxu0 0.0
  %1643 = vmatprep.mubr.f32.mxu0 0.0
  %1644 = vmatmul.mubr.f32.gmra.mrb[0].mxu0 %v1546
  %v1645 = vpop.f32.mrb[0].mxu0
  %v1646 = vadd.f32 0.0, %v1645
  %v1647 = vpop.f32.mrb[0].mxu0
  %1648 = vmatprep.mubr.f32.mxu0 0.0
  %1649 = vmatmul.mubr.f32.gmra.mrb[0].mxu0 %v1547
  %v1650 = vpop.f32.mrb[0].mxu0
  %v1651 = vadd.f32 0.0, %v1650
  %v1652 = vpop.f32.mrb[0].mxu0
  %1653 = vmatprep.mubr.f32.mxu0 0.0
  %1654 = vmatmul.mubr.f32.gmra.mrb[0].mxu0 %v1548
  %v1655 = vpop.f32.mrb[0].mxu0
  %v1656 = vadd.f32 0.0, %v1655
  %v1657 = vpop.f32.mrb[0].mxu0
  %1658 = vmatprep.mubr.f32.mxu0 0.0
  %1659 = vmatmul.mubr.f32.gmra.mrb[0].mxu0 %v1549
  %v1660 = vpop.f32.mrb[0].mxu0
  %v1661 = vadd.f32 0.0, %v1660
  %v1662 = vpop.f32.mrb[0].mxu0
  %1663 = vmatprep.mubr.f32.mxu0 0.0
  %1664 = vmatmul.mubr.f32.gmra.mrb[0].mxu0 %v1550
  %v1665 = vpop.f32.mrb[0].mxu0
  %v1666 = vadd.f32 0.0, %v1665
  %v1667 = vpop.f32.mrb[0].mxu0
  %1668 = vmatprep.mubr.f32.mxu0 0.0
  %1669 = vmatmul.mubr.f32.gmra.mrb[0].mxu0 %v1551
  %v1670 = vpop.f32.mrb[0].mxu0
  %v1671 = vadd.f32 0.0, %v1670
  %v1672 = vpop.f32.mrb[0].mxu0
  %1673 = vmatprep.mubr.f32.mxu0 0.0
  %1674 = vmatmul.mubr.f32.gmra.mrb[0].mxu0 %v1552
  %v1675 = vpop.f32.mrb[0].mxu0
  %v1676 = vadd.f32 0.0, %v1675
  %v1677 = vpop.f32.mrb[0].mxu0
  %1678 = vmatprep.mubr.f32.mxu0 0.0
  %1679 = vmatmul.mubr.f32.gmra.mrb[0].mxu0 %v1553
  %v1680 = vpop.f32.mrb[0].mxu0
  %v1681 = vadd.f32 0.0, %v1680
  %v1682 = vpop.f32.mrb[0].mxu0
  %1683 = vmatprep.mubr.f32.mxu0 0.0
  %1684 = vmatmul.mubr.f32.gmra.mrb[0].mxu0 %v1554
  %v1685 = vpop.f32.mrb[0].mxu0
  %v1686 = vadd.f32 0.0, %v1685
  %v1687 = vpop.f32.mrb[0].mxu0
  %1688 = vmatprep.mubr.f32.mxu0 0.0
  %1689 = vmatmul.mubr.f32.gmra.mrb[0].mxu0 %v1555
  %v1690 = vpop.f32.mrb[0].mxu0
  %v1691 = vadd.f32 0.0, %v1690
  %v1692 = vpop.f32.mrb[0].mxu0
  %1693 = vmatprep.mubr.f32.mxu0 0.0
  %1694 = vmatmul.mubr.f32.gmra.mrb[0].mxu0 %v1556
  %v1695 = vpop.f32.mrb[0].mxu0
  %v1696 = vadd.f32 0.0, %v1695
  %v1697 = vpop.f32.mrb[0].mxu0
  %1698 = vmatprep.mubr.f32.mxu0 0.0
  %1699 = vmatmul.mubr.f32.gmra.mrb[0].mxu0 %v1557
  %v1700 = vpop.f32.mrb[0].mxu0
  %v1701 = vadd.f32 0.0, %v1700
  %v1702 = vpop.f32.mrb[0].mxu0
  %1703 = vmatprep.mubr.f32.mxu0 0.0
  %1704 = vmatmul.mubr.f32.gmra.mrb[0].mxu0 %v1558
  %v1705 = vpop.f32.mrb[0].mxu0
  %v1706 = vadd.f32 0.0, %v1705
  %v1707 = vpop.f32.mrb[0].mxu0
  %1708 = vmatprep.mubr.f32.mxu0 0.0
  %1709 = vmatmul.mubr.f32.gmra.mrb[0].mxu0 %v1559
  %v1710 = vpop.f32.mrb[0].mxu0
  %v1711 = vadd.f32 0.0, %v1710
  %v1712 = vpop.f32.mrb[0].mxu0
  %1713 = vmatprep.mubr.f32.mxu0 0.0
  %1714 = vmatmul.mubr.f32.gmra.mrb[0].mxu0 %v1560
  %v1715 = vpop.f32.mrb[0].mxu0
  %v1716 = vadd.f32 0.0, %v1715
  %v1717 = vpop.f32.mrb[0].mxu0
  %1718 = vmatprep.mubr.f32.mxu0 0.0
  %1719 = vmatmul.mubr.f32.gmra.mrb[0].mxu0 %v1561
  %v1720 = vpop.f32.mrb[0].mxu0
  %v1721 = vadd.f32 0.0, %v1720
  %v1722 = vpop.f32.mrb[0].mxu0
  %1723 = vdwg.mxu0
  %v1724 = vadd.f32 %v1307, %v1646
  %v1725 = vadd.f32 %v1312, %v1651
  %v1726 = vadd.f32 %v1317, %v1656
  %v1727 = vadd.f32 %v1322, %v1661
  %v1728 = vadd.f32 %v1327, %v1666
  %v1729 = vadd.f32 %v1332, %v1671
  %v1730 = vadd.f32 %v1337, %v1676
  %v1731 = vadd.f32 %v1342, %v1681
  %v1732 = vadd.f32 %v1347, %v1686
  %v1733 = vadd.f32 %v1352, %v1691
  %v1734 = vadd.f32 %v1357, %v1696
  %v1735 = vadd.f32 %v1362, %v1701
  %v1736 = vadd.f32 %v1367, %v1706
  %v1737 = vadd.f32 %v1372, %v1711
  %v1738 = vadd.f32 %v1377, %v1716
  %v1739 = vadd.f32 %v1382, %v1721
  %v1740 = vld [vmem:[%s5] sm:$0x1]
  %v1742 = vlaneseq
  %v1743 = vshrl.u32 %v1742, 7
  %v1744 = vsub.s32 0, %v1743
  %v1745 = vrot.slane %v1740, %v1744
  %v1747 = vadd.f32 %v1724, %v1745
  %v1748 = vadd.f32 %v1725, %v1745
  %v1749 = vadd.f32 %v1726, %v1745
  %v1750 = vadd.f32 %v1727, %v1745
  %v1751 = vadd.f32 %v1728, %v1745
  %v1752 = vadd.f32 %v1729, %v1745
  %v1753 = vadd.f32 %v1730, %v1745
  %v1754 = vadd.f32 %v1731, %v1745
  %v1755 = vadd.f32 %v1732, %v1745
  %v1756 = vadd.f32 %v1733, %v1745
  %v1757 = vadd.f32 %v1734, %v1745
  %v1758 = vadd.f32 %v1735, %v1745
  %v1759 = vadd.f32 %v1736, %v1745
  %v1760 = vadd.f32 %v1737, %v1745
  %v1761 = vadd.f32 %v1738, %v1745
  %v1762 = vadd.f32 %v1739, %v1745
  %1763 = vst [vmem:[%s6] sm:$0xff] %v1747
  %1764 = vst [vmem:[%s6 + $0x8] sm:$0xff] %v1748
  %1765 = vst [vmem:[%s6 + $0x10] sm:$0xff] %v1749
  %1766 = vst [vmem:[%s6 + $0x18] sm:$0xff] %v1750
  %1767 = vst [vmem:[%s6 + $0x20] sm:$0xff] %v1751
  %1768 = vst [vmem:[%s6 + $0x28] sm:$0xff] %v1752
  %1769 = vst [vmem:[%s6 + $0x30] sm:$0xff] %v1753
  %1770 = vst [vmem:[%s6 + $0x38] sm:$0xff] %v1754
  %1771 = vst [vmem:[%s6 + $0x40] sm:$0xff] %v1755
  %1772 = vst [vmem:[%s6 + $0x48] sm:$0xff] %v1756
  %1773 = vst [vmem:[%s6 + $0x50] sm:$0xff] %v1757
  %1774 = vst [vmem:[%s6 + $0x58] sm:$0xff] %v1758
  %1775 = vst [vmem:[%s6 + $0x60] sm:$0xff] %v1759
  %1776 = vst [vmem:[%s6 + $0x68] sm:$0xff] %v1760
  %1777 = vst [vmem:[%s6 + $0x70] sm:$0xff] %v1761
  %1778 = vst [vmem:[%s6 + $0x78] sm:$0xff] %v1762
  // Predicated region
  $region26: #{chebnet_forward.1} parent=0 // pred_check
    _
  $region27: #{chebnet_forward.1} parent=0 // pred_check_branch
    %1780 = sbr.rel (0) target = $region29
  $region28: #{chebnet_forward.1} parent=0 // pred_region
    _
  $region29: #{chebnet_forward.1} parent=0 // pred_fallthru
    _
  // Predicated region
  $region30: #{chebnet_forward.1} parent=0 // pred_check
    _
  $region31: #{chebnet_forward.1} parent=0 // pred_check_branch
    %1782 = sbr.rel (0) target = $region33
  $region32: #{chebnet_forward.1} parent=0 // pred_region
    _
  $region33: #{chebnet_forward.1} parent=0 // pred_fallthru
    _

</llo_original>
